<compile_context>
chip_gen: v7x
topology: tpu7x:2x2x1
jax: 0.10.0
libtpu: 0.0.40
codegen_flags: <defaults>
</compile_context>

<pallas_src>
import functools

import jax
import jax.numpy as jnp
from jax.experimental import pallas as pl
from jax.experimental.pallas import tpu as pltpu

_MIB = 1024 * 1024


def _invlinear_kernel(x_ref, w_ref, y_ref):
    """y[i-block, j-block] = sum_k x[i-block, k-block] @ W[k-block, j-block].

    The f32 output block is resident across the (last, "arbitrary") K axis.
    k == 0 writes the MXU result directly; k > 0 accumulates — no zero-init
    store / reload / VPU add on the first step.
    """
    k = pl.program_id(2)
    prod = jnp.dot(x_ref[...], w_ref[...], preferred_element_type=jnp.float32)

    @pl.when(k == 0)
    def _():
        y_ref[...] = prod

    @pl.when(k > 0)
    def _():
        y_ref[...] += prod


def _pad_to(n, unit):
    return ((n + unit - 1) // unit) * unit


def _pick_tile(dim, unit, cap):
    """Largest multiple of `unit` that divides `dim` and is <= cap.

    Callers pad `dim` up to a multiple of `unit`, so a divisor always exists
    (worst case `unit` itself)."""
    t = min(cap, dim)
    t -= t % unit
    while t >= unit:
        if dim % t == 0:
            return t
        t -= unit
    return dim


def _vmem_capacity_bytes():
    """Per-core VMEM capacity (128 MiB v5e/v6e, 64 MiB v7x); conservative fallback."""
    try:
        return int(pltpu.get_tpu_info().vmem_capacity_bytes)
    except Exception:
        return 64 * _MIB  # assume the smallest (v7x) if the query is unavailable


def invertible_linear_pallas(x2d, w):
    """x2d: (N, D) f32, w: (D, D) -> y2d: (N, D) f32 with y = x @ W (bf16 operands, f32 acc)."""
    N, D = x2d.shape
    assert w.shape == (D, D)

    # --- wrapper-side padding ------------------------------------------------
    # Batch (sublane) dim -> bf16 sublane pack (16) so stores stay unmasked.
    n_pad = _pad_to(N, 16)
    # Feature dim -> multiple of 128 so every tile is lane-dense and the (D, D)
    # weight never has to become a single full-extent block (bounded VMEM).
    d_pad = _pad_to(D, 128)
    if n_pad != N or d_pad != D:
        x2d = jnp.pad(x2d, ((0, n_pad - N), (0, d_pad - D)))
    if d_pad != D:
        # Zero rows/cols: padded K entries contribute 0, padded output cols are sliced off.
        w = jnp.pad(w, ((0, d_pad - D), (0, d_pad - D)))

    # bf16 operands (f32 MXU accumulation): halves the dominant W HBM read.
    # XLA fuses this cast with the pad above; negligible for the tiny shipped N.
    x_bf = x2d.astype(jnp.bfloat16)
    w_bf = w.astype(jnp.bfloat16)

    # --- per-generation tiling -------------------------------------------------
    vmem_cap = _vmem_capacity_bytes()
    dual_tc = vmem_cap <= 64 * _MIB            # v7x: 64 MiB VMEM, 2 TensorCores / chip
    vmem_budget = (32 * _MIB) if dual_tc else (56 * _MIB)

    tm = _pick_tile(n_pad, 16, 256)
    if dual_tc and d_pad >= 256:
        # Guarantee >= 2 steps on the "parallel" j axis so the grid shards across
        # both v7x TensorCores (each streams half of W on this DMA-bound kernel).
        tn = _pick_tile(d_pad, 128, max(128, d_pad // 2))
    else:
        # Single-TC 128-MiB parts (v5e/v6e): biggest, fully contiguous W row tiles.
        tn = _pick_tile(d_pad, 128, 1024)
    tk = _pick_tile(d_pad, 128, 4096)

    def vmem_need(tm_, tn_, tk_):
        # double-buffered bf16 x and W tiles + pipelined f32 output tile
        return 2 * (tm_ * tk_ * 2) + 2 * (tk_ * tn_ * 2) + 2 * (tm_ * tn_ * 4)

    # Shrink K tiles (then output-column tiles) until we fit the budget with 2x headroom.
    while 2 * vmem_need(tm, tn, tk) > vmem_budget and tk > 128:
        tk = _pick_tile(d_pad, 128, tk // 2)
    while 2 * vmem_need(tm, tn, tk) > vmem_budget and tn > 128:
        tn = _pick_tile(d_pad, 128, tn // 2)

    grid = (n_pad // tm, d_pad // tn, d_pad // tk)
    vmem_limit = int(min(max(2 * vmem_need(tm, tn, tk), 8 * _MIB), vmem_budget))

    # Advisory cost: lets XLA overlap the surrounding pad/cast/reshape/full ops.
    cost = pl.CostEstimate(
        flops=2 * n_pad * d_pad * d_pad,
        transcendentals=0,
        bytes_accessed=(
            n_pad * d_pad * 2                              # x read (bf16)
            + (n_pad // tm) * d_pad * d_pad * 2            # W read per i-block (bf16)
            + n_pad * d_pad * 4                            # y write (f32)
        ),
    )

    y = pl.pallas_call(
        _invlinear_kernel,
        out_shape=jax.ShapeDtypeStruct((n_pad, d_pad), jnp.float32),
        grid_spec=pl.GridSpec(
            grid=grid,
            in_specs=[
                pl.BlockSpec((tm, tk), lambda i, j, k: (i, k)),   # x K-tile
                pl.BlockSpec((tk, tn), lambda i, j, k: (k, j)),   # W (K, N-col) tile
            ],
            out_specs=pl.BlockSpec((tm, tn), lambda i, j, k: (i, j)),  # resident across K
        ),
        compiler_params=pltpu.CompilerParams(
            dimension_semantics=("parallel", "parallel", "arbitrary"),
            vmem_limit_bytes=vmem_limit,
        ),
        cost_estimate=cost,
    )(x_bf, w_bf)

    return y[:N, :D]


class InvertibleSequentialPallas:
    """JAX/Pallas equivalent of InvertibleSequential(InvertibleReshapeLayer, InvertibleLinearFlow)."""

    def __init__(self, in_shape_chw):
        C, H, W = in_shape_chw
        self.in_shape = (C, H, W)
        self.dim = C * H * W
        # Deterministic, well-conditioned invertible weight: near-identity perturbation.
        key = jax.random.PRNGKey(42)
        pert = jax.random.normal(key, (self.dim, self.dim), dtype=jnp.float32)
        w = jnp.eye(self.dim, dtype=jnp.float32) + 0.01 * pert
        # Kernel uses bf16 operands, so the canonical parameter is the bf16-rounded
        # weight (reference and logdet stay consistent with the kernel numerics).
        self.w_bf16 = w.astype(jnp.bfloat16)
        self.w = self.w_bf16.astype(jnp.float32)
        _, self.logdet = jnp.linalg.slogdet(self.w)  # parameter-only setup, not the hot path

    @functools.partial(jax.jit, static_argnums=0)
    def __call__(self, x_nchw):
        N = x_nchw.shape[0]
        # InvertibleReshapeLayer forward: (N, C, H, W) -> (N, D)   [pure metadata]
        x2d = jnp.reshape(x_nchw, (N, self.dim)).astype(jnp.float32)
        # Invertible net (Pallas kernel): y = x @ W
        y2d = invertible_linear_pallas(x2d, self.w_bf16)
        # sldj = log|det W| per example — broadcast in the wrapper (a lane-width-1
        # kernel output would force masked partial stores).
        sldj = jnp.full((N,), self.logdet, dtype=jnp.float32)
        # InvertibleReshapeLayer reverse: (N, D) -> (N, C, H, W)   [pure metadata]
        y = jnp.reshape(y2d, (N,) + self.in_shape)
        return y, sldj


if __name__ == "__main__":
    # Small shapes consistent with an NCHW conv-style input.
    N, C, H, W = 2, 4, 16, 16
    key = jax.random.PRNGKey(0)
    x = jax.random.normal(key, (N, C, H, W), dtype=jnp.float32)

    model = InvertibleSequentialPallas((C, H, W))
    y, sldj = model(x)
    jax.block_until_ready((y, sldj))

    # Reference with the same bf16-operand / f32-accumulate numerics as the kernel.
    x2d_q = jnp.reshape(x, (N, C * H * W)).astype(jnp.bfloat16).astype(jnp.float32)
    y_ref = jnp.reshape(x2d_q @ model.w, (N, C, H, W))

    assert y.shape == (N, C, H, W)
    assert sldj.shape == (N,)
    assert jnp.allclose(y, y_ref, atol=2e-3, rtol=2e-3), float(jnp.max(jnp.abs(y - y_ref)))
    assert jnp.allclose(sldj, jnp.full((N,), model.logdet), atol=1e-5)

    print("KERNEL_OK")
</pallas_src>

<mosaic_0001>
module attributes {stable_mosaic.version = 11 : i64} {
  func.func @_invlinear_kernel(%arg0: i32, %arg1: i32, %arg2: i32, %arg3: memref<16x1024xbf16, #tpu.memory_space<vmem>>, %arg4: memref<1024x512xbf16, #tpu.memory_space<vmem>>, %arg5: memref<16x512xf32, #tpu.memory_space<vmem>>) attributes {dimension_semantics = [#tpu.dimension_semantics<parallel>, #tpu.dimension_semantics<parallel>, #tpu.dimension_semantics<arbitrary>], iteration_bounds = array<i64: 1, 2, 1>, scalar_prefetch = 0 : i64, scratch_operands = 0 : i64, tpu.core_type = #tpu.core_type<tc>, window_params = [{transform_indices = @transform_0, window_bounds = array<i64: 16, 1024>}, {transform_indices = @transform_1, window_bounds = array<i64: 1024, 512>}, {transform_indices = @transform_2, window_bounds = array<i64: 16, 512>}]} {
    %c0 = arith.constant 0 : index
    %c0_0 = arith.constant 0 : index
    %0 = vector.load %arg3[%c0, %c0_0] : memref<16x1024xbf16, #tpu.memory_space<vmem>>, vector<16x1024xbf16>
    %c0_1 = arith.constant 0 : index
    %c0_2 = arith.constant 0 : index
    %1 = vector.load %arg4[%c0_1, %c0_2] : memref<1024x512xbf16, #tpu.memory_space<vmem>>, vector<1024x512xbf16>
    %cst = arith.constant dense<0.000000e+00> : vector<16x512xf32>
    %2 = tpu.matmul %0, %1, %cst {dimension_numbers = #tpu.dot_dimension_numbers<[1], [0], [0], [1], [0, 0, 1, 1], [], []>} : vector<16x1024xbf16>, vector<1024x512xbf16>, vector<16x512xf32> -> vector<16x512xf32>
    %c0_i32 = arith.constant 0 : i32
    %3 = arith.cmpi eq, %arg2, %c0_i32 : i32
    %4 = arith.extui %3 : i1 to i32
    %c0_i32_3 = arith.constant 0 : i32
    %5 = arith.cmpi ne, %4, %c0_i32_3 : i32
    scf.if %5 {
      %c0_6 = arith.constant 0 : index
      %c0_7 = arith.constant 0 : index
      %9 = vector.load %arg5[%c0_6, %c0_7] : memref<16x512xf32, #tpu.memory_space<vmem>>, vector<16x512xf32>
      tpu.vector_store %arg5[%c0_6, %c0_7], %2 {strides = array<i32>} : memref<16x512xf32, #tpu.memory_space<vmem>>, vector<16x512xf32>,
    } else {
    }
    %c0_i32_4 = arith.constant 0 : i32
    %6 = arith.cmpi sgt, %arg2, %c0_i32_4 : i32
    %7 = arith.extui %6 : i1 to i32
    %c0_i32_5 = arith.constant 0 : i32
    %8 = arith.cmpi ne, %7, %c0_i32_5 : i32
    scf.if %8 {
      %c0_6 = arith.constant 0 : index
      %c0_7 = arith.constant 0 : index
      %9 = vector.load %arg5[%c0_6, %c0_7] : memref<16x512xf32, #tpu.memory_space<vmem>>, vector<16x512xf32>
      %10 = arith.addf %9, %2 : vector<16x512xf32>
      %c0_8 = arith.constant 0 : index
      %c0_9 = arith.constant 0 : index
      %11 = vector.load %arg5[%c0_8, %c0_9] : memref<16x512xf32, #tpu.memory_space<vmem>>, vector<16x512xf32>
      tpu.vector_store %arg5[%c0_8, %c0_9], %10 {strides = array<i32>} : memref<16x512xf32, #tpu.memory_space<vmem>>, vector<16x512xf32>,
    } else {
    }
    return
  }
  func.func @transform_0(%arg0: i32, %arg1: i32, %arg2: i32) -> (i32, i32) {
    %c0_i32 = arith.constant 0 : i32
    return %arg0, %arg2 : i32, i32
  }
  func.func @transform_1(%arg0: i32, %arg1: i32, %arg2: i32) -> (i32, i32) {
    %c0_i32 = arith.constant 0 : i32
    return %arg2, %arg1 : i32, i32
  }
  func.func @transform_2(%arg0: i32, %arg1: i32, %arg2: i32) -> (i32, i32) {
    %c0_i32 = arith.constant 0 : i32
    return %arg0, %arg1 : i32, i32
  }
}

</mosaic_0001>

<llo_original>
// kernel: a_call__.1
$region0: #{a_call__.1}
  #allocation0 [shape = 'u32[]', space=smem, size = 0x4, offset = 0x4, fixed_abs, tag = 'smem constant byte address 0x4 - core index']
  #allocation1 [shape = 'u32[144,128]{1,0:T(1,128)}', space=vmem, size = 0x12000, scoped, tag = 'internal scratch']
  %s0 = inlined_call_operand.vmem [shape: bf16[16,1024], index: 0, kind: input, shape index: {}]
  %s1 = inlined_call_operand.vmem [shape: bf16[1024,1024], index: 1, kind: input, shape index: {}]
  %s2 = inlined_call_operand.vmem [shape: f32[16,1024], index: 2, kind: output, shape index: {}]
  %s3 = sld [smem:[#allocation0]]
  $region91: #{a_call__.1} parent=0
    _
  %s5 = ssub.s32 1, %s3
  %s6 = scalar_select 0, %s5, %s3
  $region1: #{a_call__.1} parent=0
    #allocation2 [shape = 'u8[2097152]{0}', space=vmem, size = 0x200000, scoped, tag = 'input window, operand 1']
    #allocation3 [shape = 'u8[65536]{0}', space=vmem, size = 0x10000, scoped, tag = 'output window, operand 0']
    loop: start=0, step=1, limit=4
    $region2: #{a_call__.1} parent=1 // loop_pre_header
      _
    $region3: #{a_call__.1} parent=1 // loop_header
      %s8 = sphi 0, %s12
      %p9 = scmp.ge.s32.totalorder %s8, 4
      %s15 = sphi 0, %s34
      %s16 = sphi 0, %s30
      %s17 = sphi 0, %s26
      %s18 = sphi 0, %s15
      %s19 = sphi 0, %s16
      %s20 = sphi 0, %s17
      %s21 = sphi 0, %s18
      %s22 = sphi 0, %s19
      %s23 = sphi 0, %s20
      %s39 = sphi 0, %s41
      %s42 = sphi 0, %s39
      %s43 = sphi 0, %s42
      %s59 = sphi 0, %s43
      %s67 = sphi 0, %s69
      %s70 = sphi 0, %s67
      %s71 = sphi 0, %s70
      %s87 = sphi 0, %s71
      %s95 = sphi 0, %s97
      %s98 = sphi 0, %s95
      %s99 = sphi 0, %s98
      %s115 = sphi 0, %s99
    $region4: #{a_call__.1} parent=1 // loop_header_branch
      %11 = sbr.rel (%p9) target = $region8
    $region5: #{a_call__.1} parent=1 // loop_body
      %s13 = ssub.s32 %s8, 1
      %s14 = ssub.s32 %s8, 2
      %s24 = sadd.s32 1, %s17
      %p25 = scmp.ge.s32.totalorder %s24, 1
      %s26 = scalar_select %p25, 0, %s24
      %s27 = sadd.s32 1, %s16
      %s28 = scalar_select %p25, %s27, %s16
      %p29 = scmp.ge.s32.totalorder %s28, 2
      %s30 = scalar_select %p29, 0, %s28
      %s31 = sadd.s32 1, %s15
      %s32 = scalar_select %p29, %s31, %s15
      %p33 = scmp.ge.s32.totalorder %s32, 1
      %s34 = scalar_select %p33, 0, %s32
      %s35 = ssub.s32 %s15, %s34
      %s36 = ssub.s32 %s17, %s26
      %s37 = sor.u32 %s35, %s36
      %p38 = scmp.eq.s32.totalorder %s37, 0
      %s40 = sadd.s32 %s39, 1
      %s41 = scalar_select %p38, %s39, %s40
      %p44 = pneg %p38
      %p45 = scmp.eq.s32.totalorder %s8, 1
      %p46 = por %p44, %p45
      %p47 = scmp.ne.s32.totalorder %s39, %s42
      %p48 = scmp.eq.s32.totalorder %s8, 0
      %p49 = por %p47, %p48
      %p50 = scmp.ne.s32.totalorder %s39, %s42
      %p51 = scmp.eq.s32.totalorder %s13, 1
      %p52 = por %p50, %p51
      %p53 = scmp.ne.s32.totalorder %s42, %s43
      %p54 = scmp.eq.s32.totalorder %s13, 0
      %p55 = por %p53, %p54
      %p56 = scmp.ne.s32.totalorder %s42, %s43
      %p57 = scmp.eq.s32.totalorder %s14, 1
      %p58 = por %p56, %p57
      %p60 = scmp.ne.s32.totalorder %s43, %s59
      %p61 = scmp.eq.s32.totalorder %s14, 0
      %p62 = por %p60, %p61
      %s63 = ssub.s32 %s17, %s26
      %s64 = ssub.s32 %s16, %s30
      %s65 = sor.u32 %s63, %s64
      %p66 = scmp.eq.s32.totalorder %s65, 0
      %s68 = sadd.s32 %s67, 1
      %s69 = scalar_select %p66, %s67, %s68
      %p72 = pneg %p66
      %p73 = scmp.eq.s32.totalorder %s8, 1
      %p74 = por %p72, %p73
      %p75 = scmp.ne.s32.totalorder %s67, %s70
      %p76 = scmp.eq.s32.totalorder %s8, 0
      %p77 = por %p75, %p76
      %p78 = scmp.ne.s32.totalorder %s67, %s70
      %p79 = scmp.eq.s32.totalorder %s13, 1
      %p80 = por %p78, %p79
      %p81 = scmp.ne.s32.totalorder %s70, %s71
      %p82 = scmp.eq.s32.totalorder %s13, 0
      %p83 = por %p81, %p82
      %p84 = scmp.ne.s32.totalorder %s70, %s71
      %p85 = scmp.eq.s32.totalorder %s14, 1
      %p86 = por %p84, %p85
      %p88 = scmp.ne.s32.totalorder %s71, %s87
      %p89 = scmp.eq.s32.totalorder %s14, 0
      %p90 = por %p88, %p89
      %s91 = ssub.s32 %s15, %s34
      %s92 = ssub.s32 %s16, %s30
      %s93 = sor.u32 %s91, %s92
      %p94 = scmp.eq.s32.totalorder %s93, 0
      %s96 = sadd.s32 %s95, 1
      %s97 = scalar_select %p94, %s95, %s96
      %p100 = pneg %p94
      %p101 = scmp.eq.s32.totalorder %s8, 1
      %p102 = por %p100, %p101
      %p103 = scmp.ne.s32.totalorder %s95, %s98
      %p104 = scmp.eq.s32.totalorder %s8, 0
      %p105 = por %p103, %p104
      %p106 = scmp.ne.s32.totalorder %s95, %s98
      %p107 = scmp.eq.s32.totalorder %s13, 1
      %p108 = por %p106, %p107
      %p109 = scmp.ne.s32.totalorder %s98, %s99
      %p110 = scmp.eq.s32.totalorder %s13, 0
      %p111 = por %p109, %p110
      %p112 = scmp.ne.s32.totalorder %s98, %s99
      %p113 = scmp.eq.s32.totalorder %s14, 1
      %p114 = por %p112, %p113
      %p116 = scmp.ne.s32.totalorder %s99, %s115
      %p117 = scmp.eq.s32.totalorder %s14, 0
      %p118 = por %p116, %p117
      %p119 = scmp.le.s32.totalorder 1, %s8
      %p120 = scmp.lt.s32.totalorder %s8, 3
      %p121 = pnand %p119, %p120
      %p122 = pneg %p121
      // Predicated region
      $region9: #{a_call__.1} parent=5 // pred_check
        _
      $region10: #{a_call__.1} parent=5 // pred_check_branch
        %124 = sbr.rel (%p121) target = $region12
      $region11: #{a_call__.1} parent=5 // pred_region
        %s125 = ssub.s32 %s8, 1
        // Predicated region
        $region13: #{a_call__.1} parent=11 // pred_check
          %p126 = pneg %p55
        $region14: #{a_call__.1} parent=11 // pred_check_branch
          %128 = sbr.rel (%p126) target = $region16
        $region15: #{a_call__.1} parent=11 // pred_region
          %s129 = smul.u32 2, %s18
          %s130 = smul.u32 8, %s20
          %p131 = scmp.lt.s32.totalorder %s129, 1
          %s132 = scalar_select %p131, %s129, 1
          %p133 = scmp.lt.s32.totalorder %s130, 7
          %s134 = scalar_select %p133, %s130, 7
          %s135 = smul.addr %s132, 8
          %s136 = sadd.s32 %s134, %s135
          %s137 = smul.addr %s136, 4
          %s138 = scalar_lea.vmem %s0, %s137
          %s139 = smul.u32 2, %s18
          %s140 = smul.u32 8, %s20
        $region16: #{a_call__.1} parent=11 // pred_fallthru
          _
      $region12: #{a_call__.1} parent=5 // pred_fallthru
        _
      %p141 = scmp.lt.s32.totalorder %s8, 2
      // Predicated region
      $region17: #{a_call__.1} parent=5 // pred_check
        %p142 = pneg %p141
      $region18: #{a_call__.1} parent=5 // pred_check_branch
        %144 = sbr.rel (%p142) target = $region20
      $region19: #{a_call__.1} parent=5 // pred_region
        // Predicated region
        $region21: #{a_call__.1} parent=19 // pred_check
          %p145 = pneg %p77
        $region22: #{a_call__.1} parent=19 // pred_check_branch
          %147 = sbr.rel (%p145) target = $region24
        $region23: #{a_call__.1} parent=19 // pred_region
          %s148 = sand.u32 %s67, 1
          %s149 = sand.u32 %s67, 1
          %s150 = smul.addr %s149, 2048
          %s151 = scalar_lea.vmem [#allocation2], %s150
          %s152 = smul.u32 128, %s17
          %s153 = smul.u32 4, %s16
          %s154 = smul.addr %s152, 8
          %s155 = sadd.s32 %s153, %s154
          %s156 = smul.addr %s155, 4
          %s157 = scalar_lea.vmem %s1, %s156
          // Predicated region
          $region25: #{a_call__.1} parent=23 // pred_check
            _
          $region26: #{a_call__.1} parent=23 // pred_check_branch
            %159 = sbr.rel (0) target = $region28
          $region27: #{a_call__.1} parent=23 // pred_region
            // Predicated region
            $region29: #{a_call__.1} parent=27 // pred_check
              _
            $region30: #{a_call__.1} parent=27 // pred_check_branch
              %161 = sbr.rel (0) target = $region32
            $region31: #{a_call__.1} parent=27 // pred_region
              loop: start=0, step=1, limit=1
              $region33: #{a_call__.1} parent=31 // loop_pre_header
                _
              $region34: #{a_call__.1} parent=31 // loop_header
                %s163 = sphi 0, %s167
                %p164 = scmp.ge.s32.totalorder %s163, 1
                %s168 = sphi %s157, %s157
                %s169 = sphi %s151, %s151
              $region35: #{a_call__.1} parent=31 // loop_header_branch
                %166 = sbr.rel (%p164) target = $region39
              $region36: #{a_call__.1} parent=31 // loop_body
                %v170 = vld [vmem:[%s168] sm:$0xff]
                %171 = vst [vmem:[%s169] sm:$0xff] %v170
                %v172 = vld [vmem:[%s168 + $0x8] sm:$0xff]
                %173 = vst [vmem:[%s169 + $0x8] sm:$0xff] %v172
                %v174 = vld [vmem:[%s168 + $0x20] sm:$0xff]
                %175 = vst [vmem:[%s169 + $0x10] sm:$0xff] %v174
                %v176 = vld [vmem:[%s168 + $0x28] sm:$0xff]
                %177 = vst [vmem:[%s169 + $0x18] sm:$0xff] %v176
                %v178 = vld [vmem:[%s168 + $0x40] sm:$0xff]
                %179 = vst [vmem:[%s169 + $0x20] sm:$0xff] %v178
                %v180 = vld [vmem:[%s168 + $0x48] sm:$0xff]
                %181 = vst [vmem:[%s169 + $0x28] sm:$0xff] %v180
                %v182 = vld [vmem:[%s168 + $0x60] sm:$0xff]
                %183 = vst [vmem:[%s169 + $0x30] sm:$0xff] %v182
                %v184 = vld [vmem:[%s168 + $0x68] sm:$0xff]
                %185 = vst [vmem:[%s169 + $0x38] sm:$0xff] %v184
                %v186 = vld [vmem:[%s168 + $0x80] sm:$0xff]
                %187 = vst [vmem:[%s169 + $0x40] sm:$0xff] %v186
                %v188 = vld [vmem:[%s168 + $0x88] sm:$0xff]
                %189 = vst [vmem:[%s169 + $0x48] sm:$0xff] %v188
                %v190 = vld [vmem:[%s168 + $0xa0] sm:$0xff]
                %191 = vst [vmem:[%s169 + $0x50] sm:$0xff] %v190
                %v192 = vld [vmem:[%s168 + $0xa8] sm:$0xff]
                %193 = vst [vmem:[%s169 + $0x58] sm:$0xff] %v192
                %v194 = vld [vmem:[%s168 + $0xc0] sm:$0xff]
                %195 = vst [vmem:[%s169 + $0x60] sm:$0xff] %v194
                %v196 = vld [vmem:[%s168 + $0xc8] sm:$0xff]
                %197 = vst [vmem:[%s169 + $0x68] sm:$0xff] %v196
                %v198 = vld [vmem:[%s168 + $0xe0] sm:$0xff]
                %199 = vst [vmem:[%s169 + $0x70] sm:$0xff] %v198
                %v200 = vld [vmem:[%s168 + $0xe8] sm:$0xff]
                %201 = vst [vmem:[%s169 + $0x78] sm:$0xff] %v200
                %v202 = vld [vmem:[%s168 + $0x100] sm:$0xff]
                %203 = vst [vmem:[%s169 + $0x80] sm:$0xff] %v202
                %v204 = vld [vmem:[%s168 + $0x108] sm:$0xff]
                %205 = vst [vmem:[%s169 + $0x88] sm:$0xff] %v204
                %v206 = vld [vmem:[%s168 + $0x120] sm:$0xff]
                %207 = vst [vmem:[%s169 + $0x90] sm:$0xff] %v206
                %v208 = vld [vmem:[%s168 + $0x128] sm:$0xff]
                %209 = vst [vmem:[%s169 + $0x98] sm:$0xff] %v208
                %v210 = vld [vmem:[%s168 + $0x140] sm:$0xff]
                %211 = vst [vmem:[%s169 + $0xa0] sm:$0xff] %v210
                %v212 = vld [vmem:[%s168 + $0x148] sm:$0xff]
                %213 = vst [vmem:[%s169 + $0xa8] sm:$0xff] %v212
                %v214 = vld [vmem:[%s168 + $0x160] sm:$0xff]
                %215 = vst [vmem:[%s169 + $0xb0] sm:$0xff] %v214
                %v216 = vld [vmem:[%s168 + $0x168] sm:$0xff]
                %217 = vst [vmem:[%s169 + $0xb8] sm:$0xff] %v216
                %v218 = vld [vmem:[%s168 + $0x180] sm:$0xff]
                %219 = vst [vmem:[%s169 + $0xc0] sm:$0xff] %v218
                %v220 = vld [vmem:[%s168 + $0x188] sm:$0xff]
                %221 = vst [vmem:[%s169 + $0xc8] sm:$0xff] %v220
                %v222 = vld [vmem:[%s168 + $0x1a0] sm:$0xff]
                %223 = vst [vmem:[%s169 + $0xd0] sm:$0xff] %v222
                %v224 = vld [vmem:[%s168 + $0x1a8] sm:$0xff]
                %225 = vst [vmem:[%s169 + $0xd8] sm:$0xff] %v224
                %v226 = vld [vmem:[%s168 + $0x1c0] sm:$0xff]
                %227 = vst [vmem:[%s169 + $0xe0] sm:$0xff] %v226
                %v228 = vld [vmem:[%s168 + $0x1c8] sm:$0xff]
                %229 = vst [vmem:[%s169 + $0xe8] sm:$0xff] %v228
                %v230 = vld [vmem:[%s168 + $0x1e0] sm:$0xff]
                %231 = vst [vmem:[%s169 + $0xf0] sm:$0xff] %v230
                %v232 = vld [vmem:[%s168 + $0x1e8] sm:$0xff]
                %233 = vst [vmem:[%s169 + $0xf8] sm:$0xff] %v232
                %v234 = vld [vmem:[%s168 + $0x200] sm:$0xff]
                %235 = vst [vmem:[%s169 + $0x100] sm:$0xff] %v234
                %v236 = vld [vmem:[%s168 + $0x208] sm:$0xff]
                %237 = vst [vmem:[%s169 + $0x108] sm:$0xff] %v236
                %v238 = vld [vmem:[%s168 + $0x220] sm:$0xff]
                %239 = vst [vmem:[%s169 + $0x110] sm:$0xff] %v238
                %v240 = vld [vmem:[%s168 + $0x228] sm:$0xff]
                %241 = vst [vmem:[%s169 + $0x118] sm:$0xff] %v240
                %v242 = vld [vmem:[%s168 + $0x240] sm:$0xff]
                %243 = vst [vmem:[%s169 + $0x120] sm:$0xff] %v242
                %v244 = vld [vmem:[%s168 + $0x248] sm:$0xff]
                %245 = vst [vmem:[%s169 + $0x128] sm:$0xff] %v244
                %v246 = vld [vmem:[%s168 + $0x260] sm:$0xff]
                %247 = vst [vmem:[%s169 + $0x130] sm:$0xff] %v246
                %v248 = vld [vmem:[%s168 + $0x268] sm:$0xff]
                %249 = vst [vmem:[%s169 + $0x138] sm:$0xff] %v248
                %v250 = vld [vmem:[%s168 + $0x280] sm:$0xff]
                %251 = vst [vmem:[%s169 + $0x140] sm:$0xff] %v250
                %v252 = vld [vmem:[%s168 + $0x288] sm:$0xff]
                %253 = vst [vmem:[%s169 + $0x148] sm:$0xff] %v252
                %v254 = vld [vmem:[%s168 + $0x2a0] sm:$0xff]
                %255 = vst [vmem:[%s169 + $0x150] sm:$0xff] %v254
                %v256 = vld [vmem:[%s168 + $0x2a8] sm:$0xff]
                %257 = vst [vmem:[%s169 + $0x158] sm:$0xff] %v256
                %v258 = vld [vmem:[%s168 + $0x2c0] sm:$0xff]
                %259 = vst [vmem:[%s169 + $0x160] sm:$0xff] %v258
                %v260 = vld [vmem:[%s168 + $0x2c8] sm:$0xff]
                %261 = vst [vmem:[%s169 + $0x168] sm:$0xff] %v260
                %v262 = vld [vmem:[%s168 + $0x2e0] sm:$0xff]
                %263 = vst [vmem:[%s169 + $0x170] sm:$0xff] %v262
                %v264 = vld [vmem:[%s168 + $0x2e8] sm:$0xff]
                %265 = vst [vmem:[%s169 + $0x178] sm:$0xff] %v264
                %v266 = vld [vmem:[%s168 + $0x300] sm:$0xff]
                %267 = vst [vmem:[%s169 + $0x180] sm:$0xff] %v266
                %v268 = vld [vmem:[%s168 + $0x308] sm:$0xff]
                %269 = vst [vmem:[%s169 + $0x188] sm:$0xff] %v268
                %v270 = vld [vmem:[%s168 + $0x320] sm:$0xff]
                %271 = vst [vmem:[%s169 + $0x190] sm:$0xff] %v270
                %v272 = vld [vmem:[%s168 + $0x328] sm:$0xff]
                %273 = vst [vmem:[%s169 + $0x198] sm:$0xff] %v272
                %v274 = vld [vmem:[%s168 + $0x340] sm:$0xff]
                %275 = vst [vmem:[%s169 + $0x1a0] sm:$0xff] %v274
                %v276 = vld [vmem:[%s168 + $0x348] sm:$0xff]
                %277 = vst [vmem:[%s169 + $0x1a8] sm:$0xff] %v276
                %v278 = vld [vmem:[%s168 + $0x360] sm:$0xff]
                %279 = vst [vmem:[%s169 + $0x1b0] sm:$0xff] %v278
                %v280 = vld [vmem:[%s168 + $0x368] sm:$0xff]
                %281 = vst [vmem:[%s169 + $0x1b8] sm:$0xff] %v280
                %v282 = vld [vmem:[%s168 + $0x380] sm:$0xff]
                %283 = vst [vmem:[%s169 + $0x1c0] sm:$0xff] %v282
                %v284 = vld [vmem:[%s168 + $0x388] sm:$0xff]
                %285 = vst [vmem:[%s169 + $0x1c8] sm:$0xff] %v284
                %v286 = vld [vmem:[%s168 + $0x3a0] sm:$0xff]
                %287 = vst [vmem:[%s169 + $0x1d0] sm:$0xff] %v286
                %v288 = vld [vmem:[%s168 + $0x3a8] sm:$0xff]
                %289 = vst [vmem:[%s169 + $0x1d8] sm:$0xff] %v288
                %v290 = vld [vmem:[%s168 + $0x3c0] sm:$0xff]
                %291 = vst [vmem:[%s169 + $0x1e0] sm:$0xff] %v290
                %v292 = vld [vmem:[%s168 + $0x3c8] sm:$0xff]
                %293 = vst [vmem:[%s169 + $0x1e8] sm:$0xff] %v292
                %v294 = vld [vmem:[%s168 + $0x3e0] sm:$0xff]
                %295 = vst [vmem:[%s169 + $0x1f0] sm:$0xff] %v294
                %v296 = vld [vmem:[%s168 + $0x3e8] sm:$0xff]
                %297 = vst [vmem:[%s169 + $0x1f8] sm:$0xff] %v296
                %v298 = vld [vmem:[%s168 + $0x400] sm:$0xff]
                %299 = vst [vmem:[%s169 + $0x200] sm:$0xff] %v298
                %v300 = vld [vmem:[%s168 + $0x408] sm:$0xff]
                %301 = vst [vmem:[%s169 + $0x208] sm:$0xff] %v300
                %v302 = vld [vmem:[%s168 + $0x420] sm:$0xff]
                %303 = vst [vmem:[%s169 + $0x210] sm:$0xff] %v302
                %v304 = vld [vmem:[%s168 + $0x428] sm:$0xff]
                %305 = vst [vmem:[%s169 + $0x218] sm:$0xff] %v304
                %v306 = vld [vmem:[%s168 + $0x440] sm:$0xff]
                %307 = vst [vmem:[%s169 + $0x220] sm:$0xff] %v306
                %v308 = vld [vmem:[%s168 + $0x448] sm:$0xff]
                %309 = vst [vmem:[%s169 + $0x228] sm:$0xff] %v308
                %v310 = vld [vmem:[%s168 + $0x460] sm:$0xff]
                %311 = vst [vmem:[%s169 + $0x230] sm:$0xff] %v310
                %v312 = vld [vmem:[%s168 + $0x468] sm:$0xff]
                %313 = vst [vmem:[%s169 + $0x238] sm:$0xff] %v312
                %v314 = vld [vmem:[%s168 + $0x480] sm:$0xff]
                %315 = vst [vmem:[%s169 + $0x240] sm:$0xff] %v314
                %v316 = vld [vmem:[%s168 + $0x488] sm:$0xff]
                %317 = vst [vmem:[%s169 + $0x248] sm:$0xff] %v316
                %v318 = vld [vmem:[%s168 + $0x4a0] sm:$0xff]
                %319 = vst [vmem:[%s169 + $0x250] sm:$0xff] %v318
                %v320 = vld [vmem:[%s168 + $0x4a8] sm:$0xff]
                %321 = vst [vmem:[%s169 + $0x258] sm:$0xff] %v320
                %v322 = vld [vmem:[%s168 + $0x4c0] sm:$0xff]
                %323 = vst [vmem:[%s169 + $0x260] sm:$0xff] %v322
                %v324 = vld [vmem:[%s168 + $0x4c8] sm:$0xff]
                %325 = vst [vmem:[%s169 + $0x268] sm:$0xff] %v324
                %v326 = vld [vmem:[%s168 + $0x4e0] sm:$0xff]
                %327 = vst [vmem:[%s169 + $0x270] sm:$0xff] %v326
                %v328 = vld [vmem:[%s168 + $0x4e8] sm:$0xff]
                %329 = vst [vmem:[%s169 + $0x278] sm:$0xff] %v328
                %v330 = vld [vmem:[%s168 + $0x500] sm:$0xff]
                %331 = vst [vmem:[%s169 + $0x280] sm:$0xff] %v330
                %v332 = vld [vmem:[%s168 + $0x508] sm:$0xff]
                %333 = vst [vmem:[%s169 + $0x288] sm:$0xff] %v332
                %v334 = vld [vmem:[%s168 + $0x520] sm:$0xff]
                %335 = vst [vmem:[%s169 + $0x290] sm:$0xff] %v334
                %v336 = vld [vmem:[%s168 + $0x528] sm:$0xff]
                %337 = vst [vmem:[%s169 + $0x298] sm:$0xff] %v336
                %v338 = vld [vmem:[%s168 + $0x540] sm:$0xff]
                %339 = vst [vmem:[%s169 + $0x2a0] sm:$0xff] %v338
                %v340 = vld [vmem:[%s168 + $0x548] sm:$0xff]
                %341 = vst [vmem:[%s169 + $0x2a8] sm:$0xff] %v340
                %v342 = vld [vmem:[%s168 + $0x560] sm:$0xff]
                %343 = vst [vmem:[%s169 + $0x2b0] sm:$0xff] %v342
                %v344 = vld [vmem:[%s168 + $0x568] sm:$0xff]
                %345 = vst [vmem:[%s169 + $0x2b8] sm:$0xff] %v344
                %v346 = vld [vmem:[%s168 + $0x580] sm:$0xff]
                %347 = vst [vmem:[%s169 + $0x2c0] sm:$0xff] %v346
                %v348 = vld [vmem:[%s168 + $0x588] sm:$0xff]
                %349 = vst [vmem:[%s169 + $0x2c8] sm:$0xff] %v348
                %v350 = vld [vmem:[%s168 + $0x5a0] sm:$0xff]
                %351 = vst [vmem:[%s169 + $0x2d0] sm:$0xff] %v350
                %v352 = vld [vmem:[%s168 + $0x5a8] sm:$0xff]
                %353 = vst [vmem:[%s169 + $0x2d8] sm:$0xff] %v352
                %v354 = vld [vmem:[%s168 + $0x5c0] sm:$0xff]
                %355 = vst [vmem:[%s169 + $0x2e0] sm:$0xff] %v354
                %v356 = vld [vmem:[%s168 + $0x5c8] sm:$0xff]
                %357 = vst [vmem:[%s169 + $0x2e8] sm:$0xff] %v356
                %v358 = vld [vmem:[%s168 + $0x5e0] sm:$0xff]
                %359 = vst [vmem:[%s169 + $0x2f0] sm:$0xff] %v358
                %v360 = vld [vmem:[%s168 + $0x5e8] sm:$0xff]
                %361 = vst [vmem:[%s169 + $0x2f8] sm:$0xff] %v360
                %v362 = vld [vmem:[%s168 + $0x600] sm:$0xff]
                %363 = vst [vmem:[%s169 + $0x300] sm:$0xff] %v362
                %v364 = vld [vmem:[%s168 + $0x608] sm:$0xff]
                %365 = vst [vmem:[%s169 + $0x308] sm:$0xff] %v364
                %v366 = vld [vmem:[%s168 + $0x620] sm:$0xff]
                %367 = vst [vmem:[%s169 + $0x310] sm:$0xff] %v366
                %v368 = vld [vmem:[%s168 + $0x628] sm:$0xff]
                %369 = vst [vmem:[%s169 + $0x318] sm:$0xff] %v368
                %v370 = vld [vmem:[%s168 + $0x640] sm:$0xff]
                %371 = vst [vmem:[%s169 + $0x320] sm:$0xff] %v370
                %v372 = vld [vmem:[%s168 + $0x648] sm:$0xff]
                %373 = vst [vmem:[%s169 + $0x328] sm:$0xff] %v372
                %v374 = vld [vmem:[%s168 + $0x660] sm:$0xff]
                %375 = vst [vmem:[%s169 + $0x330] sm:$0xff] %v374
                %v376 = vld [vmem:[%s168 + $0x668] sm:$0xff]
                %377 = vst [vmem:[%s169 + $0x338] sm:$0xff] %v376
                %v378 = vld [vmem:[%s168 + $0x680] sm:$0xff]
                %379 = vst [vmem:[%s169 + $0x340] sm:$0xff] %v378
                %v380 = vld [vmem:[%s168 + $0x688] sm:$0xff]
                %381 = vst [vmem:[%s169 + $0x348] sm:$0xff] %v380
                %v382 = vld [vmem:[%s168 + $0x6a0] sm:$0xff]
                %383 = vst [vmem:[%s169 + $0x350] sm:$0xff] %v382
                %v384 = vld [vmem:[%s168 + $0x6a8] sm:$0xff]
                %385 = vst [vmem:[%s169 + $0x358] sm:$0xff] %v384
                %v386 = vld [vmem:[%s168 + $0x6c0] sm:$0xff]
                %387 = vst [vmem:[%s169 + $0x360] sm:$0xff] %v386
                %v388 = vld [vmem:[%s168 + $0x6c8] sm:$0xff]
                %389 = vst [vmem:[%s169 + $0x368] sm:$0xff] %v388
                %v390 = vld [vmem:[%s168 + $0x6e0] sm:$0xff]
                %391 = vst [vmem:[%s169 + $0x370] sm:$0xff] %v390
                %v392 = vld [vmem:[%s168 + $0x6e8] sm:$0xff]
                %393 = vst [vmem:[%s169 + $0x378] sm:$0xff] %v392
                %v394 = vld [vmem:[%s168 + $0x700] sm:$0xff]
                %395 = vst [vmem:[%s169 + $0x380] sm:$0xff] %v394
                %v396 = vld [vmem:[%s168 + $0x708] sm:$0xff]
                %397 = vst [vmem:[%s169 + $0x388] sm:$0xff] %v396
                %v398 = vld [vmem:[%s168 + $0x720] sm:$0xff]
                %399 = vst [vmem:[%s169 + $0x390] sm:$0xff] %v398
                %v400 = vld [vmem:[%s168 + $0x728] sm:$0xff]
                %401 = vst [vmem:[%s169 + $0x398] sm:$0xff] %v400
                %v402 = vld [vmem:[%s168 + $0x740] sm:$0xff]
                %403 = vst [vmem:[%s169 + $0x3a0] sm:$0xff] %v402
                %v404 = vld [vmem:[%s168 + $0x748] sm:$0xff]
                %405 = vst [vmem:[%s169 + $0x3a8] sm:$0xff] %v404
                %v406 = vld [vmem:[%s168 + $0x760] sm:$0xff]
                %407 = vst [vmem:[%s169 + $0x3b0] sm:$0xff] %v406
                %v408 = vld [vmem:[%s168 + $0x768] sm:$0xff]
                %409 = vst [vmem:[%s169 + $0x3b8] sm:$0xff] %v408
                %v410 = vld [vmem:[%s168 + $0x780] sm:$0xff]
                %411 = vst [vmem:[%s169 + $0x3c0] sm:$0xff] %v410
                %v412 = vld [vmem:[%s168 + $0x788] sm:$0xff]
                %413 = vst [vmem:[%s169 + $0x3c8] sm:$0xff] %v412
                %v414 = vld [vmem:[%s168 + $0x7a0] sm:$0xff]
                %415 = vst [vmem:[%s169 + $0x3d0] sm:$0xff] %v414
                %v416 = vld [vmem:[%s168 + $0x7a8] sm:$0xff]
                %417 = vst [vmem:[%s169 + $0x3d8] sm:$0xff] %v416
                %v418 = vld [vmem:[%s168 + $0x7c0] sm:$0xff]
                %419 = vst [vmem:[%s169 + $0x3e0] sm:$0xff] %v418
                %v420 = vld [vmem:[%s168 + $0x7c8] sm:$0xff]
                %421 = vst [vmem:[%s169 + $0x3e8] sm:$0xff] %v420
                %v422 = vld [vmem:[%s168 + $0x7e0] sm:$0xff]
                %423 = vst [vmem:[%s169 + $0x3f0] sm:$0xff] %v422
                %v424 = vld [vmem:[%s168 + $0x7e8] sm:$0xff]
                %425 = vst [vmem:[%s169 + $0x3f8] sm:$0xff] %v424
                %v426 = vld [vmem:[%s168 + $0x800] sm:$0xff]
                %427 = vst [vmem:[%s169 + $0x400] sm:$0xff] %v426
                %v428 = vld [vmem:[%s168 + $0x808] sm:$0xff]
                %429 = vst [vmem:[%s169 + $0x408] sm:$0xff] %v428
                %v430 = vld [vmem:[%s168 + $0x820] sm:$0xff]
                %431 = vst [vmem:[%s169 + $0x410] sm:$0xff] %v430
                %v432 = vld [vmem:[%s168 + $0x828] sm:$0xff]
                %433 = vst [vmem:[%s169 + $0x418] sm:$0xff] %v432
                %v434 = vld [vmem:[%s168 + $0x840] sm:$0xff]
                %435 = vst [vmem:[%s169 + $0x420] sm:$0xff] %v434
                %v436 = vld [vmem:[%s168 + $0x848] sm:$0xff]
                %437 = vst [vmem:[%s169 + $0x428] sm:$0xff] %v436
                %v438 = vld [vmem:[%s168 + $0x860] sm:$0xff]
                %439 = vst [vmem:[%s169 + $0x430] sm:$0xff] %v438
                %v440 = vld [vmem:[%s168 + $0x868] sm:$0xff]
                %441 = vst [vmem:[%s169 + $0x438] sm:$0xff] %v440
                %v442 = vld [vmem:[%s168 + $0x880] sm:$0xff]
                %443 = vst [vmem:[%s169 + $0x440] sm:$0xff] %v442
                %v444 = vld [vmem:[%s168 + $0x888] sm:$0xff]
                %445 = vst [vmem:[%s169 + $0x448] sm:$0xff] %v444
                %v446 = vld [vmem:[%s168 + $0x8a0] sm:$0xff]
                %447 = vst [vmem:[%s169 + $0x450] sm:$0xff] %v446
                %v448 = vld [vmem:[%s168 + $0x8a8] sm:$0xff]
                %449 = vst [vmem:[%s169 + $0x458] sm:$0xff] %v448
                %v450 = vld [vmem:[%s168 + $0x8c0] sm:$0xff]
                %451 = vst [vmem:[%s169 + $0x460] sm:$0xff] %v450
                %v452 = vld [vmem:[%s168 + $0x8c8] sm:$0xff]
                %453 = vst [vmem:[%s169 + $0x468] sm:$0xff] %v452
                %v454 = vld [vmem:[%s168 + $0x8e0] sm:$0xff]
                %455 = vst [vmem:[%s169 + $0x470] sm:$0xff] %v454
                %v456 = vld [vmem:[%s168 + $0x8e8] sm:$0xff]
                %457 = vst [vmem:[%s169 + $0x478] sm:$0xff] %v456
                %v458 = vld [vmem:[%s168 + $0x900] sm:$0xff]
                %459 = vst [vmem:[%s169 + $0x480] sm:$0xff] %v458
                %v460 = vld [vmem:[%s168 + $0x908] sm:$0xff]
                %461 = vst [vmem:[%s169 + $0x488] sm:$0xff] %v460
                %v462 = vld [vmem:[%s168 + $0x920] sm:$0xff]
                %463 = vst [vmem:[%s169 + $0x490] sm:$0xff] %v462
                %v464 = vld [vmem:[%s168 + $0x928] sm:$0xff]
                %465 = vst [vmem:[%s169 + $0x498] sm:$0xff] %v464
                %v466 = vld [vmem:[%s168 + $0x940] sm:$0xff]
                %467 = vst [vmem:[%s169 + $0x4a0] sm:$0xff] %v466
                %v468 = vld [vmem:[%s168 + $0x948] sm:$0xff]
                %469 = vst [vmem:[%s169 + $0x4a8] sm:$0xff] %v468
                %v470 = vld [vmem:[%s168 + $0x960] sm:$0xff]
                %471 = vst [vmem:[%s169 + $0x4b0] sm:$0xff] %v470
                %v472 = vld [vmem:[%s168 + $0x968] sm:$0xff]
                %473 = vst [vmem:[%s169 + $0x4b8] sm:$0xff] %v472
                %v474 = vld [vmem:[%s168 + $0x980] sm:$0xff]
                %475 = vst [vmem:[%s169 + $0x4c0] sm:$0xff] %v474
                %v476 = vld [vmem:[%s168 + $0x988] sm:$0xff]
                %477 = vst [vmem:[%s169 + $0x4c8] sm:$0xff] %v476
                %v478 = vld [vmem:[%s168 + $0x9a0] sm:$0xff]
                %479 = vst [vmem:[%s169 + $0x4d0] sm:$0xff] %v478
                %v480 = vld [vmem:[%s168 + $0x9a8] sm:$0xff]
                %481 = vst [vmem:[%s169 + $0x4d8] sm:$0xff] %v480
                %v482 = vld [vmem:[%s168 + $0x9c0] sm:$0xff]
                %483 = vst [vmem:[%s169 + $0x4e0] sm:$0xff] %v482
                %v484 = vld [vmem:[%s168 + $0x9c8] sm:$0xff]
                %485 = vst [vmem:[%s169 + $0x4e8] sm:$0xff] %v484
                %v486 = vld [vmem:[%s168 + $0x9e0] sm:$0xff]
                %487 = vst [vmem:[%s169 + $0x4f0] sm:$0xff] %v486
                %v488 = vld [vmem:[%s168 + $0x9e8] sm:$0xff]
                %489 = vst [vmem:[%s169 + $0x4f8] sm:$0xff] %v488
                %v490 = vld [vmem:[%s168 + $0xa00] sm:$0xff]
                %491 = vst [vmem:[%s169 + $0x500] sm:$0xff] %v490
                %v492 = vld [vmem:[%s168 + $0xa08] sm:$0xff]
                %493 = vst [vmem:[%s169 + $0x508] sm:$0xff] %v492
                %v494 = vld [vmem:[%s168 + $0xa20] sm:$0xff]
                %495 = vst [vmem:[%s169 + $0x510] sm:$0xff] %v494
                %v496 = vld [vmem:[%s168 + $0xa28] sm:$0xff]
                %497 = vst [vmem:[%s169 + $0x518] sm:$0xff] %v496
                %v498 = vld [vmem:[%s168 + $0xa40] sm:$0xff]
                %499 = vst [vmem:[%s169 + $0x520] sm:$0xff] %v498
                %v500 = vld [vmem:[%s168 + $0xa48] sm:$0xff]
                %501 = vst [vmem:[%s169 + $0x528] sm:$0xff] %v500
                %v502 = vld [vmem:[%s168 + $0xa60] sm:$0xff]
                %503 = vst [vmem:[%s169 + $0x530] sm:$0xff] %v502
                %v504 = vld [vmem:[%s168 + $0xa68] sm:$0xff]
                %505 = vst [vmem:[%s169 + $0x538] sm:$0xff] %v504
                %v506 = vld [vmem:[%s168 + $0xa80] sm:$0xff]
                %507 = vst [vmem:[%s169 + $0x540] sm:$0xff] %v506
                %v508 = vld [vmem:[%s168 + $0xa88] sm:$0xff]
                %509 = vst [vmem:[%s169 + $0x548] sm:$0xff] %v508
                %v510 = vld [vmem:[%s168 + $0xaa0] sm:$0xff]
                %511 = vst [vmem:[%s169 + $0x550] sm:$0xff] %v510
                %v512 = vld [vmem:[%s168 + $0xaa8] sm:$0xff]
                %513 = vst [vmem:[%s169 + $0x558] sm:$0xff] %v512
                %v514 = vld [vmem:[%s168 + $0xac0] sm:$0xff]
                %515 = vst [vmem:[%s169 + $0x560] sm:$0xff] %v514
                %v516 = vld [vmem:[%s168 + $0xac8] sm:$0xff]
                %517 = vst [vmem:[%s169 + $0x568] sm:$0xff] %v516
                %v518 = vld [vmem:[%s168 + $0xae0] sm:$0xff]
                %519 = vst [vmem:[%s169 + $0x570] sm:$0xff] %v518
                %v520 = vld [vmem:[%s168 + $0xae8] sm:$0xff]
                %521 = vst [vmem:[%s169 + $0x578] sm:$0xff] %v520
                %v522 = vld [vmem:[%s168 + $0xb00] sm:$0xff]
                %523 = vst [vmem:[%s169 + $0x580] sm:$0xff] %v522
                %v524 = vld [vmem:[%s168 + $0xb08] sm:$0xff]
                %525 = vst [vmem:[%s169 + $0x588] sm:$0xff] %v524
                %v526 = vld [vmem:[%s168 + $0xb20] sm:$0xff]
                %527 = vst [vmem:[%s169 + $0x590] sm:$0xff] %v526
                %v528 = vld [vmem:[%s168 + $0xb28] sm:$0xff]
                %529 = vst [vmem:[%s169 + $0x598] sm:$0xff] %v528
                %v530 = vld [vmem:[%s168 + $0xb40] sm:$0xff]
                %531 = vst [vmem:[%s169 + $0x5a0] sm:$0xff] %v530
                %v532 = vld [vmem:[%s168 + $0xb48] sm:$0xff]
                %533 = vst [vmem:[%s169 + $0x5a8] sm:$0xff] %v532
                %v534 = vld [vmem:[%s168 + $0xb60] sm:$0xff]
                %535 = vst [vmem:[%s169 + $0x5b0] sm:$0xff] %v534
                %v536 = vld [vmem:[%s168 + $0xb68] sm:$0xff]
                %537 = vst [vmem:[%s169 + $0x5b8] sm:$0xff] %v536
                %v538 = vld [vmem:[%s168 + $0xb80] sm:$0xff]
                %539 = vst [vmem:[%s169 + $0x5c0] sm:$0xff] %v538
                %v540 = vld [vmem:[%s168 + $0xb88] sm:$0xff]
                %541 = vst [vmem:[%s169 + $0x5c8] sm:$0xff] %v540
                %v542 = vld [vmem:[%s168 + $0xba0] sm:$0xff]
                %543 = vst [vmem:[%s169 + $0x5d0] sm:$0xff] %v542
                %v544 = vld [vmem:[%s168 + $0xba8] sm:$0xff]
                %545 = vst [vmem:[%s169 + $0x5d8] sm:$0xff] %v544
                %v546 = vld [vmem:[%s168 + $0xbc0] sm:$0xff]
                %547 = vst [vmem:[%s169 + $0x5e0] sm:$0xff] %v546
                %v548 = vld [vmem:[%s168 + $0xbc8] sm:$0xff]
                %549 = vst [vmem:[%s169 + $0x5e8] sm:$0xff] %v548
                %v550 = vld [vmem:[%s168 + $0xbe0] sm:$0xff]
                %551 = vst [vmem:[%s169 + $0x5f0] sm:$0xff] %v550
                %v552 = vld [vmem:[%s168 + $0xbe8] sm:$0xff]
                %553 = vst [vmem:[%s169 + $0x5f8] sm:$0xff] %v552
                %v554 = vld [vmem:[%s168 + $0xc00] sm:$0xff]
                %555 = vst [vmem:[%s169 + $0x600] sm:$0xff] %v554
                %v556 = vld [vmem:[%s168 + $0xc08] sm:$0xff]
                %557 = vst [vmem:[%s169 + $0x608] sm:$0xff] %v556
                %v558 = vld [vmem:[%s168 + $0xc20] sm:$0xff]
                %559 = vst [vmem:[%s169 + $0x610] sm:$0xff] %v558
                %v560 = vld [vmem:[%s168 + $0xc28] sm:$0xff]
                %561 = vst [vmem:[%s169 + $0x618] sm:$0xff] %v560
                %v562 = vld [vmem:[%s168 + $0xc40] sm:$0xff]
                %563 = vst [vmem:[%s169 + $0x620] sm:$0xff] %v562
                %v564 = vld [vmem:[%s168 + $0xc48] sm:$0xff]
                %565 = vst [vmem:[%s169 + $0x628] sm:$0xff] %v564
                %v566 = vld [vmem:[%s168 + $0xc60] sm:$0xff]
                %567 = vst [vmem:[%s169 + $0x630] sm:$0xff] %v566
                %v568 = vld [vmem:[%s168 + $0xc68] sm:$0xff]
                %569 = vst [vmem:[%s169 + $0x638] sm:$0xff] %v568
                %v570 = vld [vmem:[%s168 + $0xc80] sm:$0xff]
                %571 = vst [vmem:[%s169 + $0x640] sm:$0xff] %v570
                %v572 = vld [vmem:[%s168 + $0xc88] sm:$0xff]
                %573 = vst [vmem:[%s169 + $0x648] sm:$0xff] %v572
                %v574 = vld [vmem:[%s168 + $0xca0] sm:$0xff]
                %575 = vst [vmem:[%s169 + $0x650] sm:$0xff] %v574
                %v576 = vld [vmem:[%s168 + $0xca8] sm:$0xff]
                %577 = vst [vmem:[%s169 + $0x658] sm:$0xff] %v576
                %v578 = vld [vmem:[%s168 + $0xcc0] sm:$0xff]
                %579 = vst [vmem:[%s169 + $0x660] sm:$0xff] %v578
                %v580 = vld [vmem:[%s168 + $0xcc8] sm:$0xff]
                %581 = vst [vmem:[%s169 + $0x668] sm:$0xff] %v580
                %v582 = vld [vmem:[%s168 + $0xce0] sm:$0xff]
                %583 = vst [vmem:[%s169 + $0x670] sm:$0xff] %v582
                %v584 = vld [vmem:[%s168 + $0xce8] sm:$0xff]
                %585 = vst [vmem:[%s169 + $0x678] sm:$0xff] %v584
                %v586 = vld [vmem:[%s168 + $0xd00] sm:$0xff]
                %587 = vst [vmem:[%s169 + $0x680] sm:$0xff] %v586
                %v588 = vld [vmem:[%s168 + $0xd08] sm:$0xff]
                %589 = vst [vmem:[%s169 + $0x688] sm:$0xff] %v588
                %v590 = vld [vmem:[%s168 + $0xd20] sm:$0xff]
                %591 = vst [vmem:[%s169 + $0x690] sm:$0xff] %v590
                %v592 = vld [vmem:[%s168 + $0xd28] sm:$0xff]
                %593 = vst [vmem:[%s169 + $0x698] sm:$0xff] %v592
                %v594 = vld [vmem:[%s168 + $0xd40] sm:$0xff]
                %595 = vst [vmem:[%s169 + $0x6a0] sm:$0xff] %v594
                %v596 = vld [vmem:[%s168 + $0xd48] sm:$0xff]
                %597 = vst [vmem:[%s169 + $0x6a8] sm:$0xff] %v596
                %v598 = vld [vmem:[%s168 + $0xd60] sm:$0xff]
                %599 = vst [vmem:[%s169 + $0x6b0] sm:$0xff] %v598
                %v600 = vld [vmem:[%s168 + $0xd68] sm:$0xff]
                %601 = vst [vmem:[%s169 + $0x6b8] sm:$0xff] %v600
                %v602 = vld [vmem:[%s168 + $0xd80] sm:$0xff]
                %603 = vst [vmem:[%s169 + $0x6c0] sm:$0xff] %v602
                %v604 = vld [vmem:[%s168 + $0xd88] sm:$0xff]
                %605 = vst [vmem:[%s169 + $0x6c8] sm:$0xff] %v604
                %v606 = vld [vmem:[%s168 + $0xda0] sm:$0xff]
                %607 = vst [vmem:[%s169 + $0x6d0] sm:$0xff] %v606
                %v608 = vld [vmem:[%s168 + $0xda8] sm:$0xff]
                %609 = vst [vmem:[%s169 + $0x6d8] sm:$0xff] %v608
                %v610 = vld [vmem:[%s168 + $0xdc0] sm:$0xff]
                %611 = vst [vmem:[%s169 + $0x6e0] sm:$0xff] %v610
                %v612 = vld [vmem:[%s168 + $0xdc8] sm:$0xff]
                %613 = vst [vmem:[%s169 + $0x6e8] sm:$0xff] %v612
                %v614 = vld [vmem:[%s168 + $0xde0] sm:$0xff]
                %615 = vst [vmem:[%s169 + $0x6f0] sm:$0xff] %v614
                %v616 = vld [vmem:[%s168 + $0xde8] sm:$0xff]
                %617 = vst [vmem:[%s169 + $0x6f8] sm:$0xff] %v616
                %v618 = vld [vmem:[%s168 + $0xe00] sm:$0xff]
                %619 = vst [vmem:[%s169 + $0x700] sm:$0xff] %v618
                %v620 = vld [vmem:[%s168 + $0xe08] sm:$0xff]
                %621 = vst [vmem:[%s169 + $0x708] sm:$0xff] %v620
                %v622 = vld [vmem:[%s168 + $0xe20] sm:$0xff]
                %623 = vst [vmem:[%s169 + $0x710] sm:$0xff] %v622
                %v624 = vld [vmem:[%s168 + $0xe28] sm:$0xff]
                %625 = vst [vmem:[%s169 + $0x718] sm:$0xff] %v624
                %v626 = vld [vmem:[%s168 + $0xe40] sm:$0xff]
                %627 = vst [vmem:[%s169 + $0x720] sm:$0xff] %v626
                %v628 = vld [vmem:[%s168 + $0xe48] sm:$0xff]
                %629 = vst [vmem:[%s169 + $0x728] sm:$0xff] %v628
                %v630 = vld [vmem:[%s168 + $0xe60] sm:$0xff]
                %631 = vst [vmem:[%s169 + $0x730] sm:$0xff] %v630
                %v632 = vld [vmem:[%s168 + $0xe68] sm:$0xff]
                %633 = vst [vmem:[%s169 + $0x738] sm:$0xff] %v632
                %v634 = vld [vmem:[%s168 + $0xe80] sm:$0xff]
                %635 = vst [vmem:[%s169 + $0x740] sm:$0xff] %v634
                %v636 = vld [vmem:[%s168 + $0xe88] sm:$0xff]
                %637 = vst [vmem:[%s169 + $0x748] sm:$0xff] %v636
                %v638 = vld [vmem:[%s168 + $0xea0] sm:$0xff]
                %639 = vst [vmem:[%s169 + $0x750] sm:$0xff] %v638
                %v640 = vld [vmem:[%s168 + $0xea8] sm:$0xff]
                %641 = vst [vmem:[%s169 + $0x758] sm:$0xff] %v640
                %v642 = vld [vmem:[%s168 + $0xec0] sm:$0xff]
                %643 = vst [vmem:[%s169 + $0x760] sm:$0xff] %v642
                %v644 = vld [vmem:[%s168 + $0xec8] sm:$0xff]
                %645 = vst [vmem:[%s169 + $0x768] sm:$0xff] %v644
                %v646 = vld [vmem:[%s168 + $0xee0] sm:$0xff]
                %647 = vst [vmem:[%s169 + $0x770] sm:$0xff] %v646
                %v648 = vld [vmem:[%s168 + $0xee8] sm:$0xff]
                %649 = vst [vmem:[%s169 + $0x778] sm:$0xff] %v648
                %v650 = vld [vmem:[%s168 + $0xf00] sm:$0xff]
                %651 = vst [vmem:[%s169 + $0x780] sm:$0xff] %v650
                %v652 = vld [vmem:[%s168 + $0xf08] sm:$0xff]
                %653 = vst [vmem:[%s169 + $0x788] sm:$0xff] %v652
                %v654 = vld [vmem:[%s168 + $0xf20] sm:$0xff]
                %655 = vst [vmem:[%s169 + $0x790] sm:$0xff] %v654
                %v656 = vld [vmem:[%s168 + $0xf28] sm:$0xff]
                %657 = vst [vmem:[%s169 + $0x798] sm:$0xff] %v656
                %v658 = vld [vmem:[%s168 + $0xf40] sm:$0xff]
                %659 = vst [vmem:[%s169 + $0x7a0] sm:$0xff] %v658
                %v660 = vld [vmem:[%s168 + $0xf48] sm:$0xff]
                %661 = vst [vmem:[%s169 + $0x7a8] sm:$0xff] %v660
                %v662 = vld [vmem:[%s168 + $0xf60] sm:$0xff]
                %663 = vst [vmem:[%s169 + $0x7b0] sm:$0xff] %v662
                %v664 = vld [vmem:[%s168 + $0xf68] sm:$0xff]
                %665 = vst [vmem:[%s169 + $0x7b8] sm:$0xff] %v664
                %v666 = vld [vmem:[%s168 + $0xf80] sm:$0xff]
                %667 = vst [vmem:[%s169 + $0x7c0] sm:$0xff] %v666
                %v668 = vld [vmem:[%s168 + $0xf88] sm:$0xff]
                %669 = vst [vmem:[%s169 + $0x7c8] sm:$0xff] %v668
                %v670 = vld [vmem:[%s168 + $0xfa0] sm:$0xff]
                %671 = vst [vmem:[%s169 + $0x7d0] sm:$0xff] %v670
                %v672 = vld [vmem:[%s168 + $0xfa8] sm:$0xff]
                %673 = vst [vmem:[%s169 + $0x7d8] sm:$0xff] %v672
                %v674 = vld [vmem:[%s168 + $0xfc0] sm:$0xff]
                %675 = vst [vmem:[%s169 + $0x7e0] sm:$0xff] %v674
                %v676 = vld [vmem:[%s168 + $0xfc8] sm:$0xff]
                %677 = vst [vmem:[%s169 + $0x7e8] sm:$0xff] %v676
                %v678 = vld [vmem:[%s168 + $0xfe0] sm:$0xff]
                %679 = vst [vmem:[%s169 + $0x7f0] sm:$0xff] %v678
                %v680 = vld [vmem:[%s168 + $0xfe8] sm:$0xff]
                %681 = vst [vmem:[%s169 + $0x7f8] sm:$0xff] %v680
              $region37: #{a_call__.1} parent=31 // loop_footer
                %s167 = sadd.s32 1, %s163
              $region38: #{a_call__.1} parent=31 // loop_footer_branch
                %162 = sbr.rel target = $region34
              $region39: #{a_call__.1} parent=31 // loop_exit
                _
            $region32: #{a_call__.1} parent=27 // pred_fallthru
              _
            // Predicated region
            $region40: #{a_call__.1} parent=27 // pred_check
              _
            $region41: #{a_call__.1} parent=27 // pred_check_branch
              %683 = sbr.rel target = $region43
            $region42: #{a_call__.1} parent=27 // pred_region
              _
            $region43: #{a_call__.1} parent=27 // pred_fallthru
              _
          $region28: #{a_call__.1} parent=23 // pred_fallthru
            _
          %684 = vnop
        $region24: #{a_call__.1} parent=19 // pred_fallthru
          _
      $region20: #{a_call__.1} parent=5 // pred_fallthru
        _
      %p685 = scmp.le.s32.totalorder 1, %s8
      %p686 = scmp.lt.s32.totalorder %s8, 3
      %p687 = pnand %p685, %p686
      %p688 = pneg %p687
      // Predicated region
      $region44: #{a_call__.1} parent=5 // pred_check
        _
      $region45: #{a_call__.1} parent=5 // pred_check_branch
        %690 = sbr.rel (%p687) target = $region47
      $region46: #{a_call__.1} parent=5 // pred_region
        %s691 = ssub.s32 %s8, 1
        %s692 = sand.u32 %s70, 1
        %s693 = sand.u32 %s70, 1
        %s694 = smul.addr %s693, 2048
        %s695 = scalar_lea.vmem [#allocation2], %s694
        // Predicated region
        $region48: #{a_call__.1} parent=46 // pred_check
          %p696 = pneg %p83
        $region49: #{a_call__.1} parent=46 // pred_check_branch
          %698 = sbr.rel (%p696) target = $region51
        $region50: #{a_call__.1} parent=46 // pred_region
          _
        $region51: #{a_call__.1} parent=46 // pred_fallthru
          _
        %s699 = smul.u32 2, %s18
        %s700 = smul.u32 8, %s20
        %p701 = scmp.lt.s32.totalorder %s699, 1
        %s702 = scalar_select %p701, %s699, 1
        %p703 = scmp.lt.s32.totalorder %s700, 7
        %s704 = scalar_select %p703, %s700, 7
        %s705 = smul.addr %s702, 8
        %s706 = sadd.s32 %s704, %s705
        %s707 = smul.addr %s706, 4
        %s708 = scalar_lea.vmem %s0, %s707
        %p709 = pneg %p55
        %p710 = pneg %p52
        %s711 = sand.u32 %s70, 1
        %s712 = sand.u32 %s70, 1
        %s713 = smul.addr %s712, 2048
        %s714 = scalar_lea.vmem [#allocation2], %s713
        %p715 = pneg %p83
        %p716 = pneg %p80
        %p717 = pneg %p111
        %p718 = pneg %p108
        %s719 = sand.u32 %s98, 1
        %s720 = sand.u32 %s98, 1
        %s721 = smul.addr %s720, 64
        %s722 = scalar_lea.vmem [#allocation3], %s721
        %s723 = smul.u32 2, %s18
        %s724 = smul.u32 8, %s20
        %p725 = scmp.lt.s32.totalorder %s723, 1
        %s726 = scalar_select %p725, %s723, 1
        %p727 = scmp.lt.s32.totalorder %s724, 7
        %s728 = scalar_select %p727, %s724, 7
        %s729 = smul.addr %s726, 8
        %s730 = sadd.s32 %s728, %s729
        %s731 = smul.addr %s730, 4
        %s732 = scalar_lea.vmem %s0, %s731
        %s733 = smul.u32 2, %s18
        %s734 = smul.u32 8, %s20
        %s735 = smul.u32 128, %s20
        %s736 = smul.u32 4, %s19
        %s737 = smul.u32 2, %s18
        %s738 = smul.u32 4, %s19
        %v739 = vld [vmem:[%s732] sm:$0xff]
        %v740 = vld [vmem:[%s732 + $0x8] sm:$0xff]
        %v741 = vld [vmem:[%s732 + $0x10] sm:$0xff]
        %v742 = vld [vmem:[%s732 + $0x18] sm:$0xff]
        %v743 = vld [vmem:[%s732 + $0x20] sm:$0xff]
        %v744 = vld [vmem:[%s732 + $0x28] sm:$0xff]
        %v745 = vld [vmem:[%s732 + $0x30] sm:$0xff]
        %v746 = vld [vmem:[%s732 + $0x38] sm:$0xff]
        %v747 = vld [vmem:[%s695] sm:$0xff]
        %v748 = vld [vmem:[%s695 + $0x8] sm:$0xff]
        %v749 = vld [vmem:[%s695 + $0x10] sm:$0xff]
        %v750 = vld [vmem:[%s695 + $0x18] sm:$0xff]
        %v751 = vld [vmem:[%s695 + $0x20] sm:$0xff]
        %v752 = vld [vmem:[%s695 + $0x28] sm:$0xff]
        %v753 = vld [vmem:[%s695 + $0x30] sm:$0xff]
        %v754 = vld [vmem:[%s695 + $0x38] sm:$0xff]
        %v755 = vld [vmem:[%s695 + $0x40] sm:$0xff]
        %v756 = vld [vmem:[%s695 + $0x48] sm:$0xff]
        %v757 = vld [vmem:[%s695 + $0x50] sm:$0xff]
        %v758 = vld [vmem:[%s695 + $0x58] sm:$0xff]
        %v759 = vld [vmem:[%s695 + $0x60] sm:$0xff]
        %v760 = vld [vmem:[%s695 + $0x68] sm:$0xff]
        %v761 = vld [vmem:[%s695 + $0x70] sm:$0xff]
        %v762 = vld [vmem:[%s695 + $0x78] sm:$0xff]
        %v763 = vld [vmem:[%s695 + $0x80] sm:$0xff]
        %v764 = vld [vmem:[%s695 + $0x88] sm:$0xff]
        %v765 = vld [vmem:[%s695 + $0x90] sm:$0xff]
        %v766 = vld [vmem:[%s695 + $0x98] sm:$0xff]
        %v767 = vld [vmem:[%s695 + $0xa0] sm:$0xff]
        %v768 = vld [vmem:[%s695 + $0xa8] sm:$0xff]
        %v769 = vld [vmem:[%s695 + $0xb0] sm:$0xff]
        %v770 = vld [vmem:[%s695 + $0xb8] sm:$0xff]
        %v771 = vld [vmem:[%s695 + $0xc0] sm:$0xff]
        %v772 = vld [vmem:[%s695 + $0xc8] sm:$0xff]
        %v773 = vld [vmem:[%s695 + $0xd0] sm:$0xff]
        %v774 = vld [vmem:[%s695 + $0xd8] sm:$0xff]
        %v775 = vld [vmem:[%s695 + $0xe0] sm:$0xff]
        %v776 = vld [vmem:[%s695 + $0xe8] sm:$0xff]
        %v777 = vld [vmem:[%s695 + $0xf0] sm:$0xff]
        %v778 = vld [vmem:[%s695 + $0xf8] sm:$0xff]
        %v779 = vld [vmem:[%s695 + $0x100] sm:$0xff]
        %v780 = vld [vmem:[%s695 + $0x108] sm:$0xff]
        %v781 = vld [vmem:[%s695 + $0x110] sm:$0xff]
        %v782 = vld [vmem:[%s695 + $0x118] sm:$0xff]
        %v783 = vld [vmem:[%s695 + $0x120] sm:$0xff]
        %v784 = vld [vmem:[%s695 + $0x128] sm:$0xff]
        %v785 = vld [vmem:[%s695 + $0x130] sm:$0xff]
        %v786 = vld [vmem:[%s695 + $0x138] sm:$0xff]
        %v787 = vld [vmem:[%s695 + $0x140] sm:$0xff]
        %v788 = vld [vmem:[%s695 + $0x148] sm:$0xff]
        %v789 = vld [vmem:[%s695 + $0x150] sm:$0xff]
        %v790 = vld [vmem:[%s695 + $0x158] sm:$0xff]
        %v791 = vld [vmem:[%s695 + $0x160] sm:$0xff]
        %v792 = vld [vmem:[%s695 + $0x168] sm:$0xff]
        %v793 = vld [vmem:[%s695 + $0x170] sm:$0xff]
        %v794 = vld [vmem:[%s695 + $0x178] sm:$0xff]
        %v795 = vld [vmem:[%s695 + $0x180] sm:$0xff]
        %v796 = vld [vmem:[%s695 + $0x188] sm:$0xff]
        %v797 = vld [vmem:[%s695 + $0x190] sm:$0xff]
        %v798 = vld [vmem:[%s695 + $0x198] sm:$0xff]
        %v799 = vld [vmem:[%s695 + $0x1a0] sm:$0xff]
        %v800 = vld [vmem:[%s695 + $0x1a8] sm:$0xff]
        %v801 = vld [vmem:[%s695 + $0x1b0] sm:$0xff]
        %v802 = vld [vmem:[%s695 + $0x1b8] sm:$0xff]
        %v803 = vld [vmem:[%s695 + $0x1c0] sm:$0xff]
        %v804 = vld [vmem:[%s695 + $0x1c8] sm:$0xff]
        %v805 = vld [vmem:[%s695 + $0x1d0] sm:$0xff]
        %v806 = vld [vmem:[%s695 + $0x1d8] sm:$0xff]
        %v807 = vld [vmem:[%s695 + $0x1e0] sm:$0xff]
        %v808 = vld [vmem:[%s695 + $0x1e8] sm:$0xff]
        %v809 = vld [vmem:[%s695 + $0x1f0] sm:$0xff]
        %v810 = vld [vmem:[%s695 + $0x1f8] sm:$0xff]
        %v811 = vld [vmem:[%s695 + $0x200] sm:$0xff]
        %v812 = vld [vmem:[%s695 + $0x208] sm:$0xff]
        %v813 = vld [vmem:[%s695 + $0x210] sm:$0xff]
        %v814 = vld [vmem:[%s695 + $0x218] sm:$0xff]
        %v815 = vld [vmem:[%s695 + $0x220] sm:$0xff]
        %v816 = vld [vmem:[%s695 + $0x228] sm:$0xff]
        %v817 = vld [vmem:[%s695 + $0x230] sm:$0xff]
        %v818 = vld [vmem:[%s695 + $0x238] sm:$0xff]
        %v819 = vld [vmem:[%s695 + $0x240] sm:$0xff]
        %v820 = vld [vmem:[%s695 + $0x248] sm:$0xff]
        %v821 = vld [vmem:[%s695 + $0x250] sm:$0xff]
        %v822 = vld [vmem:[%s695 + $0x258] sm:$0xff]
        %v823 = vld [vmem:[%s695 + $0x260] sm:$0xff]
        %v824 = vld [vmem:[%s695 + $0x268] sm:$0xff]
        %v825 = vld [vmem:[%s695 + $0x270] sm:$0xff]
        %v826 = vld [vmem:[%s695 + $0x278] sm:$0xff]
        %v827 = vld [vmem:[%s695 + $0x280] sm:$0xff]
        %v828 = vld [vmem:[%s695 + $0x288] sm:$0xff]
        %v829 = vld [vmem:[%s695 + $0x290] sm:$0xff]
        %v830 = vld [vmem:[%s695 + $0x298] sm:$0xff]
        %v831 = vld [vmem:[%s695 + $0x2a0] sm:$0xff]
        %v832 = vld [vmem:[%s695 + $0x2a8] sm:$0xff]
        %v833 = vld [vmem:[%s695 + $0x2b0] sm:$0xff]
        %v834 = vld [vmem:[%s695 + $0x2b8] sm:$0xff]
        %v835 = vld [vmem:[%s695 + $0x2c0] sm:$0xff]
        %v836 = vld [vmem:[%s695 + $0x2c8] sm:$0xff]
        %v837 = vld [vmem:[%s695 + $0x2d0] sm:$0xff]
        %v838 = vld [vmem:[%s695 + $0x2d8] sm:$0xff]
        %v839 = vld [vmem:[%s695 + $0x2e0] sm:$0xff]
        %v840 = vld [vmem:[%s695 + $0x2e8] sm:$0xff]
        %v841 = vld [vmem:[%s695 + $0x2f0] sm:$0xff]
        %v842 = vld [vmem:[%s695 + $0x2f8] sm:$0xff]
        %v843 = vld [vmem:[%s695 + $0x300] sm:$0xff]
        %v844 = vld [vmem:[%s695 + $0x308] sm:$0xff]
        %v845 = vld [vmem:[%s695 + $0x310] sm:$0xff]
        %v846 = vld [vmem:[%s695 + $0x318] sm:$0xff]
        %v847 = vld [vmem:[%s695 + $0x320] sm:$0xff]
        %v848 = vld [vmem:[%s695 + $0x328] sm:$0xff]
        %v849 = vld [vmem:[%s695 + $0x330] sm:$0xff]
        %v850 = vld [vmem:[%s695 + $0x338] sm:$0xff]
        %v851 = vld [vmem:[%s695 + $0x340] sm:$0xff]
        %v852 = vld [vmem:[%s695 + $0x348] sm:$0xff]
        %v853 = vld [vmem:[%s695 + $0x350] sm:$0xff]
        %v854 = vld [vmem:[%s695 + $0x358] sm:$0xff]
        %v855 = vld [vmem:[%s695 + $0x360] sm:$0xff]
        %v856 = vld [vmem:[%s695 + $0x368] sm:$0xff]
        %v857 = vld [vmem:[%s695 + $0x370] sm:$0xff]
        %v858 = vld [vmem:[%s695 + $0x378] sm:$0xff]
        %v859 = vld [vmem:[%s695 + $0x380] sm:$0xff]
        %v860 = vld [vmem:[%s695 + $0x388] sm:$0xff]
        %v861 = vld [vmem:[%s695 + $0x390] sm:$0xff]
        %v862 = vld [vmem:[%s695 + $0x398] sm:$0xff]
        %v863 = vld [vmem:[%s695 + $0x3a0] sm:$0xff]
        %v864 = vld [vmem:[%s695 + $0x3a8] sm:$0xff]
        %v865 = vld [vmem:[%s695 + $0x3b0] sm:$0xff]
        %v866 = vld [vmem:[%s695 + $0x3b8] sm:$0xff]
        %v867 = vld [vmem:[%s695 + $0x3c0] sm:$0xff]
        %v868 = vld [vmem:[%s695 + $0x3c8] sm:$0xff]
        %v869 = vld [vmem:[%s695 + $0x3d0] sm:$0xff]
        %v870 = vld [vmem:[%s695 + $0x3d8] sm:$0xff]
        %v871 = vld [vmem:[%s695 + $0x3e0] sm:$0xff]
        %v872 = vld [vmem:[%s695 + $0x3e8] sm:$0xff]
        %v873 = vld [vmem:[%s695 + $0x3f0] sm:$0xff]
        %v874 = vld [vmem:[%s695 + $0x3f8] sm:$0xff]
        %v875 = vld [vmem:[%s695 + $0x400] sm:$0xff]
        %v876 = vld [vmem:[%s695 + $0x408] sm:$0xff]
        %v877 = vld [vmem:[%s695 + $0x410] sm:$0xff]
        %v878 = vld [vmem:[%s695 + $0x418] sm:$0xff]
        %v879 = vld [vmem:[%s695 + $0x420] sm:$0xff]
        %v880 = vld [vmem:[%s695 + $0x428] sm:$0xff]
        %v881 = vld [vmem:[%s695 + $0x430] sm:$0xff]
        %v882 = vld [vmem:[%s695 + $0x438] sm:$0xff]
        %v883 = vld [vmem:[%s695 + $0x440] sm:$0xff]
        %v884 = vld [vmem:[%s695 + $0x448] sm:$0xff]
        %v885 = vld [vmem:[%s695 + $0x450] sm:$0xff]
        %v886 = vld [vmem:[%s695 + $0x458] sm:$0xff]
        %v887 = vld [vmem:[%s695 + $0x460] sm:$0xff]
        %v888 = vld [vmem:[%s695 + $0x468] sm:$0xff]
        %v889 = vld [vmem:[%s695 + $0x470] sm:$0xff]
        %v890 = vld [vmem:[%s695 + $0x478] sm:$0xff]
        %v891 = vld [vmem:[%s695 + $0x480] sm:$0xff]
        %v892 = vld [vmem:[%s695 + $0x488] sm:$0xff]
        %v893 = vld [vmem:[%s695 + $0x490] sm:$0xff]
        %v894 = vld [vmem:[%s695 + $0x498] sm:$0xff]
        %v895 = vld [vmem:[%s695 + $0x4a0] sm:$0xff]
        %v896 = vld [vmem:[%s695 + $0x4a8] sm:$0xff]
        %v897 = vld [vmem:[%s695 + $0x4b0] sm:$0xff]
        %v898 = vld [vmem:[%s695 + $0x4b8] sm:$0xff]
        %v899 = vld [vmem:[%s695 + $0x4c0] sm:$0xff]
        %v900 = vld [vmem:[%s695 + $0x4c8] sm:$0xff]
        %v901 = vld [vmem:[%s695 + $0x4d0] sm:$0xff]
        %v902 = vld [vmem:[%s695 + $0x4d8] sm:$0xff]
        %v903 = vld [vmem:[%s695 + $0x4e0] sm:$0xff]
        %v904 = vld [vmem:[%s695 + $0x4e8] sm:$0xff]
        %v905 = vld [vmem:[%s695 + $0x4f0] sm:$0xff]
        %v906 = vld [vmem:[%s695 + $0x4f8] sm:$0xff]
        %v907 = vld [vmem:[%s695 + $0x500] sm:$0xff]
        %v908 = vld [vmem:[%s695 + $0x508] sm:$0xff]
        %v909 = vld [vmem:[%s695 + $0x510] sm:$0xff]
        %v910 = vld [vmem:[%s695 + $0x518] sm:$0xff]
        %v911 = vld [vmem:[%s695 + $0x520] sm:$0xff]
        %v912 = vld [vmem:[%s695 + $0x528] sm:$0xff]
        %v913 = vld [vmem:[%s695 + $0x530] sm:$0xff]
        %v914 = vld [vmem:[%s695 + $0x538] sm:$0xff]
        %v915 = vld [vmem:[%s695 + $0x540] sm:$0xff]
        %v916 = vld [vmem:[%s695 + $0x548] sm:$0xff]
        %v917 = vld [vmem:[%s695 + $0x550] sm:$0xff]
        %v918 = vld [vmem:[%s695 + $0x558] sm:$0xff]
        %v919 = vld [vmem:[%s695 + $0x560] sm:$0xff]
        %v920 = vld [vmem:[%s695 + $0x568] sm:$0xff]
        %v921 = vld [vmem:[%s695 + $0x570] sm:$0xff]
        %v922 = vld [vmem:[%s695 + $0x578] sm:$0xff]
        %v923 = vld [vmem:[%s695 + $0x580] sm:$0xff]
        %v924 = vld [vmem:[%s695 + $0x588] sm:$0xff]
        %v925 = vld [vmem:[%s695 + $0x590] sm:$0xff]
        %v926 = vld [vmem:[%s695 + $0x598] sm:$0xff]
        %v927 = vld [vmem:[%s695 + $0x5a0] sm:$0xff]
        %v928 = vld [vmem:[%s695 + $0x5a8] sm:$0xff]
        %v929 = vld [vmem:[%s695 + $0x5b0] sm:$0xff]
        %v930 = vld [vmem:[%s695 + $0x5b8] sm:$0xff]
        %v931 = vld [vmem:[%s695 + $0x5c0] sm:$0xff]
        %v932 = vld [vmem:[%s695 + $0x5c8] sm:$0xff]
        %v933 = vld [vmem:[%s695 + $0x5d0] sm:$0xff]
        %v934 = vld [vmem:[%s695 + $0x5d8] sm:$0xff]
        %v935 = vld [vmem:[%s695 + $0x5e0] sm:$0xff]
        %v936 = vld [vmem:[%s695 + $0x5e8] sm:$0xff]
        %v937 = vld [vmem:[%s695 + $0x5f0] sm:$0xff]
        %v938 = vld [vmem:[%s695 + $0x5f8] sm:$0xff]
        %v939 = vld [vmem:[%s695 + $0x600] sm:$0xff]
        %v940 = vld [vmem:[%s695 + $0x608] sm:$0xff]
        %v941 = vld [vmem:[%s695 + $0x610] sm:$0xff]
        %v942 = vld [vmem:[%s695 + $0x618] sm:$0xff]
        %v943 = vld [vmem:[%s695 + $0x620] sm:$0xff]
        %v944 = vld [vmem:[%s695 + $0x628] sm:$0xff]
        %v945 = vld [vmem:[%s695 + $0x630] sm:$0xff]
        %v946 = vld [vmem:[%s695 + $0x638] sm:$0xff]
        %v947 = vld [vmem:[%s695 + $0x640] sm:$0xff]
        %v948 = vld [vmem:[%s695 + $0x648] sm:$0xff]
        %v949 = vld [vmem:[%s695 + $0x650] sm:$0xff]
        %v950 = vld [vmem:[%s695 + $0x658] sm:$0xff]
        %v951 = vld [vmem:[%s695 + $0x660] sm:$0xff]
        %v952 = vld [vmem:[%s695 + $0x668] sm:$0xff]
        %v953 = vld [vmem:[%s695 + $0x670] sm:$0xff]
        %v954 = vld [vmem:[%s695 + $0x678] sm:$0xff]
        %v955 = vld [vmem:[%s695 + $0x680] sm:$0xff]
        %v956 = vld [vmem:[%s695 + $0x688] sm:$0xff]
        %v957 = vld [vmem:[%s695 + $0x690] sm:$0xff]
        %v958 = vld [vmem:[%s695 + $0x698] sm:$0xff]
        %v959 = vld [vmem:[%s695 + $0x6a0] sm:$0xff]
        %v960 = vld [vmem:[%s695 + $0x6a8] sm:$0xff]
        %v961 = vld [vmem:[%s695 + $0x6b0] sm:$0xff]
        %v962 = vld [vmem:[%s695 + $0x6b8] sm:$0xff]
        %v963 = vld [vmem:[%s695 + $0x6c0] sm:$0xff]
        %v964 = vld [vmem:[%s695 + $0x6c8] sm:$0xff]
        %v965 = vld [vmem:[%s695 + $0x6d0] sm:$0xff]
        %v966 = vld [vmem:[%s695 + $0x6d8] sm:$0xff]
        %v967 = vld [vmem:[%s695 + $0x6e0] sm:$0xff]
        %v968 = vld [vmem:[%s695 + $0x6e8] sm:$0xff]
        %v969 = vld [vmem:[%s695 + $0x6f0] sm:$0xff]
        %v970 = vld [vmem:[%s695 + $0x6f8] sm:$0xff]
        %v971 = vld [vmem:[%s695 + $0x700] sm:$0xff]
        %v972 = vld [vmem:[%s695 + $0x708] sm:$0xff]
        %v973 = vld [vmem:[%s695 + $0x710] sm:$0xff]
        %v974 = vld [vmem:[%s695 + $0x718] sm:$0xff]
        %v975 = vld [vmem:[%s695 + $0x720] sm:$0xff]
        %v976 = vld [vmem:[%s695 + $0x728] sm:$0xff]
        %v977 = vld [vmem:[%s695 + $0x730] sm:$0xff]
        %v978 = vld [vmem:[%s695 + $0x738] sm:$0xff]
        %v979 = vld [vmem:[%s695 + $0x740] sm:$0xff]
        %v980 = vld [vmem:[%s695 + $0x748] sm:$0xff]
        %v981 = vld [vmem:[%s695 + $0x750] sm:$0xff]
        %v982 = vld [vmem:[%s695 + $0x758] sm:$0xff]
        %v983 = vld [vmem:[%s695 + $0x760] sm:$0xff]
        %v984 = vld [vmem:[%s695 + $0x768] sm:$0xff]
        %v985 = vld [vmem:[%s695 + $0x770] sm:$0xff]
        %v986 = vld [vmem:[%s695 + $0x778] sm:$0xff]
        %v987 = vld [vmem:[%s695 + $0x780] sm:$0xff]
        %v988 = vld [vmem:[%s695 + $0x788] sm:$0xff]
        %v989 = vld [vmem:[%s695 + $0x790] sm:$0xff]
        %v990 = vld [vmem:[%s695 + $0x798] sm:$0xff]
        %v991 = vld [vmem:[%s695 + $0x7a0] sm:$0xff]
        %v992 = vld [vmem:[%s695 + $0x7a8] sm:$0xff]
        %v993 = vld [vmem:[%s695 + $0x7b0] sm:$0xff]
        %v994 = vld [vmem:[%s695 + $0x7b8] sm:$0xff]
        %v995 = vld [vmem:[%s695 + $0x7c0] sm:$0xff]
        %v996 = vld [vmem:[%s695 + $0x7c8] sm:$0xff]
        %v997 = vld [vmem:[%s695 + $0x7d0] sm:$0xff]
        %v998 = vld [vmem:[%s695 + $0x7d8] sm:$0xff]
        %v999 = vld [vmem:[%s695 + $0x7e0] sm:$0xff]
        %v1000 = vld [vmem:[%s695 + $0x7e8] sm:$0xff]
        %v1001 = vld [vmem:[%s695 + $0x7f0] sm:$0xff]
        %v1002 = vld [vmem:[%s695 + $0x7f8] sm:$0xff]
        %v1011 = vunpack.c.l.b16 %v739
        %v1012 = vunpack.c.h.b16 %v739
        %v1013 = vunpack.c.l.b16 %v740
        %v1014 = vunpack.c.h.b16 %v740
        %v1015 = vunpack.c.l.b16 %v741
        %v1016 = vunpack.c.h.b16 %v741
        %v1017 = vunpack.c.l.b16 %v742
        %v1018 = vunpack.c.h.b16 %v742
        %v1019 = vunpack.c.l.b16 %v743
        %v1020 = vunpack.c.h.b16 %v743
        %v1021 = vunpack.c.l.b16 %v744
        %v1022 = vunpack.c.h.b16 %v744
        %v1023 = vunpack.c.l.b16 %v745
        %v1024 = vunpack.c.h.b16 %v745
        %v1025 = vunpack.c.l.b16 %v746
        %v1026 = vunpack.c.h.b16 %v746
        %v1027 = vpack.c.b16 %v1019, %v1011
        %v1028 = vpack.c.b16 %v1020, %v1012
        %v1029 = vpack.c.b16 %v1021, %v1013
        %v1030 = vpack.c.b16 %v1022, %v1014
        %v1031 = vpack.c.b16 %v1023, %v1015
        %v1032 = vpack.c.b16 %v1024, %v1016
        %v1033 = vpack.c.b16 %v1025, %v1017
        %v1034 = vpack.c.b16 %v1026, %v1018
        %v1299 = vunpack.c.l.b16 %v747
        %v1300 = vunpack.c.h.b16 %v747
        %v1301 = vunpack.c.l.b16 %v748
        %v1302 = vunpack.c.h.b16 %v748
        %v1303 = vunpack.c.l.b16 %v749
        %v1304 = vunpack.c.h.b16 %v749
        %v1305 = vunpack.c.l.b16 %v750
        %v1306 = vunpack.c.h.b16 %v750
        %v1307 = vunpack.c.l.b16 %v751
        %v1308 = vunpack.c.h.b16 %v751
        %v1309 = vunpack.c.l.b16 %v752
        %v1310 = vunpack.c.h.b16 %v752
        %v1311 = vunpack.c.l.b16 %v753
        %v1312 = vunpack.c.h.b16 %v753
        %v1313 = vunpack.c.l.b16 %v754
        %v1314 = vunpack.c.h.b16 %v754
        %v1315 = vunpack.c.l.b16 %v755
        %v1316 = vunpack.c.h.b16 %v755
        %v1317 = vunpack.c.l.b16 %v756
        %v1318 = vunpack.c.h.b16 %v756
        %v1319 = vunpack.c.l.b16 %v757
        %v1320 = vunpack.c.h.b16 %v757
        %v1321 = vunpack.c.l.b16 %v758
        %v1322 = vunpack.c.h.b16 %v758
        %v1323 = vunpack.c.l.b16 %v759
        %v1324 = vunpack.c.h.b16 %v759
        %v1325 = vunpack.c.l.b16 %v760
        %v1326 = vunpack.c.h.b16 %v760
        %v1327 = vunpack.c.l.b16 %v761
        %v1328 = vunpack.c.h.b16 %v761
        %v1329 = vunpack.c.l.b16 %v762
        %v1330 = vunpack.c.h.b16 %v762
        %v1331 = vunpack.c.l.b16 %v763
        %v1332 = vunpack.c.h.b16 %v763
        %v1333 = vunpack.c.l.b16 %v764
        %v1334 = vunpack.c.h.b16 %v764
        %v1335 = vunpack.c.l.b16 %v765
        %v1336 = vunpack.c.h.b16 %v765
        %v1337 = vunpack.c.l.b16 %v766
        %v1338 = vunpack.c.h.b16 %v766
        %v1339 = vunpack.c.l.b16 %v767
        %v1340 = vunpack.c.h.b16 %v767
        %v1341 = vunpack.c.l.b16 %v768
        %v1342 = vunpack.c.h.b16 %v768
        %v1343 = vunpack.c.l.b16 %v769
        %v1344 = vunpack.c.h.b16 %v769
        %v1345 = vunpack.c.l.b16 %v770
        %v1346 = vunpack.c.h.b16 %v770
        %v1347 = vunpack.c.l.b16 %v771
        %v1348 = vunpack.c.h.b16 %v771
        %v1349 = vunpack.c.l.b16 %v772
        %v1350 = vunpack.c.h.b16 %v772
        %v1351 = vunpack.c.l.b16 %v773
        %v1352 = vunpack.c.h.b16 %v773
        %v1353 = vunpack.c.l.b16 %v774
        %v1354 = vunpack.c.h.b16 %v774
        %v1355 = vunpack.c.l.b16 %v775
        %v1356 = vunpack.c.h.b16 %v775
        %v1357 = vunpack.c.l.b16 %v776
        %v1358 = vunpack.c.h.b16 %v776
        %v1359 = vunpack.c.l.b16 %v777
        %v1360 = vunpack.c.h.b16 %v777
        %v1361 = vunpack.c.l.b16 %v778
        %v1362 = vunpack.c.h.b16 %v778
        %v1363 = vunpack.c.l.b16 %v779
        %v1364 = vunpack.c.h.b16 %v779
        %v1365 = vunpack.c.l.b16 %v780
        %v1366 = vunpack.c.h.b16 %v780
        %v1367 = vunpack.c.l.b16 %v781
        %v1368 = vunpack.c.h.b16 %v781
        %v1369 = vunpack.c.l.b16 %v782
        %v1370 = vunpack.c.h.b16 %v782
        %v1371 = vunpack.c.l.b16 %v783
        %v1372 = vunpack.c.h.b16 %v783
        %v1373 = vunpack.c.l.b16 %v784
        %v1374 = vunpack.c.h.b16 %v784
        %v1375 = vunpack.c.l.b16 %v785
        %v1376 = vunpack.c.h.b16 %v785
        %v1377 = vunpack.c.l.b16 %v786
        %v1378 = vunpack.c.h.b16 %v786
        %v1379 = vunpack.c.l.b16 %v787
        %v1380 = vunpack.c.h.b16 %v787
        %v1381 = vunpack.c.l.b16 %v788
        %v1382 = vunpack.c.h.b16 %v788
        %v1383 = vunpack.c.l.b16 %v789
        %v1384 = vunpack.c.h.b16 %v789
        %v1385 = vunpack.c.l.b16 %v790
        %v1386 = vunpack.c.h.b16 %v790
        %v1387 = vunpack.c.l.b16 %v791
        %v1388 = vunpack.c.h.b16 %v791
        %v1389 = vunpack.c.l.b16 %v792
        %v1390 = vunpack.c.h.b16 %v792
        %v1391 = vunpack.c.l.b16 %v793
        %v1392 = vunpack.c.h.b16 %v793
        %v1393 = vunpack.c.l.b16 %v794
        %v1394 = vunpack.c.h.b16 %v794
        %v1395 = vunpack.c.l.b16 %v795
        %v1396 = vunpack.c.h.b16 %v795
        %v1397 = vunpack.c.l.b16 %v796
        %v1398 = vunpack.c.h.b16 %v796
        %v1399 = vunpack.c.l.b16 %v797
        %v1400 = vunpack.c.h.b16 %v797
        %v1401 = vunpack.c.l.b16 %v798
        %v1402 = vunpack.c.h.b16 %v798
        %v1403 = vunpack.c.l.b16 %v799
        %v1404 = vunpack.c.h.b16 %v799
        %v1405 = vunpack.c.l.b16 %v800
        %v1406 = vunpack.c.h.b16 %v800
        %v1407 = vunpack.c.l.b16 %v801
        %v1408 = vunpack.c.h.b16 %v801
        %v1409 = vunpack.c.l.b16 %v802
        %v1410 = vunpack.c.h.b16 %v802
        %v1411 = vunpack.c.l.b16 %v803
        %v1412 = vunpack.c.h.b16 %v803
        %v1413 = vunpack.c.l.b16 %v804
        %v1414 = vunpack.c.h.b16 %v804
        %v1415 = vunpack.c.l.b16 %v805
        %v1416 = vunpack.c.h.b16 %v805
        %v1417 = vunpack.c.l.b16 %v806
        %v1418 = vunpack.c.h.b16 %v806
        %v1419 = vunpack.c.l.b16 %v807
        %v1420 = vunpack.c.h.b16 %v807
        %v1421 = vunpack.c.l.b16 %v808
        %v1422 = vunpack.c.h.b16 %v808
        %v1423 = vunpack.c.l.b16 %v809
        %v1424 = vunpack.c.h.b16 %v809
        %v1425 = vunpack.c.l.b16 %v810
        %v1426 = vunpack.c.h.b16 %v810
        %v1427 = vunpack.c.l.b16 %v811
        %v1428 = vunpack.c.h.b16 %v811
        %v1429 = vunpack.c.l.b16 %v812
        %v1430 = vunpack.c.h.b16 %v812
        %v1431 = vunpack.c.l.b16 %v813
        %v1432 = vunpack.c.h.b16 %v813
        %v1433 = vunpack.c.l.b16 %v814
        %v1434 = vunpack.c.h.b16 %v814
        %v1435 = vunpack.c.l.b16 %v815
        %v1436 = vunpack.c.h.b16 %v815
        %v1437 = vunpack.c.l.b16 %v816
        %v1438 = vunpack.c.h.b16 %v816
        %v1439 = vunpack.c.l.b16 %v817
        %v1440 = vunpack.c.h.b16 %v817
        %v1441 = vunpack.c.l.b16 %v818
        %v1442 = vunpack.c.h.b16 %v818
        %v1443 = vunpack.c.l.b16 %v819
        %v1444 = vunpack.c.h.b16 %v819
        %v1445 = vunpack.c.l.b16 %v820
        %v1446 = vunpack.c.h.b16 %v820
        %v1447 = vunpack.c.l.b16 %v821
        %v1448 = vunpack.c.h.b16 %v821
        %v1449 = vunpack.c.l.b16 %v822
        %v1450 = vunpack.c.h.b16 %v822
        %v1451 = vunpack.c.l.b16 %v823
        %v1452 = vunpack.c.h.b16 %v823
        %v1453 = vunpack.c.l.b16 %v824
        %v1454 = vunpack.c.h.b16 %v824
        %v1455 = vunpack.c.l.b16 %v825
        %v1456 = vunpack.c.h.b16 %v825
        %v1457 = vunpack.c.l.b16 %v826
        %v1458 = vunpack.c.h.b16 %v826
        %v1459 = vunpack.c.l.b16 %v827
        %v1460 = vunpack.c.h.b16 %v827
        %v1461 = vunpack.c.l.b16 %v828
        %v1462 = vunpack.c.h.b16 %v828
        %v1463 = vunpack.c.l.b16 %v829
        %v1464 = vunpack.c.h.b16 %v829
        %v1465 = vunpack.c.l.b16 %v830
        %v1466 = vunpack.c.h.b16 %v830
        %v1467 = vunpack.c.l.b16 %v831
        %v1468 = vunpack.c.h.b16 %v831
        %v1469 = vunpack.c.l.b16 %v832
        %v1470 = vunpack.c.h.b16 %v832
        %v1471 = vunpack.c.l.b16 %v833
        %v1472 = vunpack.c.h.b16 %v833
        %v1473 = vunpack.c.l.b16 %v834
        %v1474 = vunpack.c.h.b16 %v834
        %v1475 = vunpack.c.l.b16 %v835
        %v1476 = vunpack.c.h.b16 %v835
        %v1477 = vunpack.c.l.b16 %v836
        %v1478 = vunpack.c.h.b16 %v836
        %v1479 = vunpack.c.l.b16 %v837
        %v1480 = vunpack.c.h.b16 %v837
        %v1481 = vunpack.c.l.b16 %v838
        %v1482 = vunpack.c.h.b16 %v838
        %v1483 = vunpack.c.l.b16 %v839
        %v1484 = vunpack.c.h.b16 %v839
        %v1485 = vunpack.c.l.b16 %v840
        %v1486 = vunpack.c.h.b16 %v840
        %v1487 = vunpack.c.l.b16 %v841
        %v1488 = vunpack.c.h.b16 %v841
        %v1489 = vunpack.c.l.b16 %v842
        %v1490 = vunpack.c.h.b16 %v842
        %v1491 = vunpack.c.l.b16 %v843
        %v1492 = vunpack.c.h.b16 %v843
        %v1493 = vunpack.c.l.b16 %v844
        %v1494 = vunpack.c.h.b16 %v844
        %v1495 = vunpack.c.l.b16 %v845
        %v1496 = vunpack.c.h.b16 %v845
        %v1497 = vunpack.c.l.b16 %v846
        %v1498 = vunpack.c.h.b16 %v846
        %v1499 = vunpack.c.l.b16 %v847
        %v1500 = vunpack.c.h.b16 %v847
        %v1501 = vunpack.c.l.b16 %v848
        %v1502 = vunpack.c.h.b16 %v848
        %v1503 = vunpack.c.l.b16 %v849
        %v1504 = vunpack.c.h.b16 %v849
        %v1505 = vunpack.c.l.b16 %v850
        %v1506 = vunpack.c.h.b16 %v850
        %v1507 = vunpack.c.l.b16 %v851
        %v1508 = vunpack.c.h.b16 %v851
        %v1509 = vunpack.c.l.b16 %v852
        %v1510 = vunpack.c.h.b16 %v852
        %v1511 = vunpack.c.l.b16 %v853
        %v1512 = vunpack.c.h.b16 %v853
        %v1513 = vunpack.c.l.b16 %v854
        %v1514 = vunpack.c.h.b16 %v854
        %v1515 = vunpack.c.l.b16 %v855
        %v1516 = vunpack.c.h.b16 %v855
        %v1517 = vunpack.c.l.b16 %v856
        %v1518 = vunpack.c.h.b16 %v856
        %v1519 = vunpack.c.l.b16 %v857
        %v1520 = vunpack.c.h.b16 %v857
        %v1521 = vunpack.c.l.b16 %v858
        %v1522 = vunpack.c.h.b16 %v858
        %v1523 = vunpack.c.l.b16 %v859
        %v1524 = vunpack.c.h.b16 %v859
        %v1525 = vunpack.c.l.b16 %v860
        %v1526 = vunpack.c.h.b16 %v860
        %v1527 = vunpack.c.l.b16 %v861
        %v1528 = vunpack.c.h.b16 %v861
        %v1529 = vunpack.c.l.b16 %v862
        %v1530 = vunpack.c.h.b16 %v862
        %v1531 = vunpack.c.l.b16 %v863
        %v1532 = vunpack.c.h.b16 %v863
        %v1533 = vunpack.c.l.b16 %v864
        %v1534 = vunpack.c.h.b16 %v864
        %v1535 = vunpack.c.l.b16 %v865
        %v1536 = vunpack.c.h.b16 %v865
        %v1537 = vunpack.c.l.b16 %v866
        %v1538 = vunpack.c.h.b16 %v866
        %v1539 = vunpack.c.l.b16 %v867
        %v1540 = vunpack.c.h.b16 %v867
        %v1541 = vunpack.c.l.b16 %v868
        %v1542 = vunpack.c.h.b16 %v868
        %v1543 = vunpack.c.l.b16 %v869
        %v1544 = vunpack.c.h.b16 %v869
        %v1545 = vunpack.c.l.b16 %v870
        %v1546 = vunpack.c.h.b16 %v870
        %v1547 = vunpack.c.l.b16 %v871
        %v1548 = vunpack.c.h.b16 %v871
        %v1549 = vunpack.c.l.b16 %v872
        %v1550 = vunpack.c.h.b16 %v872
        %v1551 = vunpack.c.l.b16 %v873
        %v1552 = vunpack.c.h.b16 %v873
        %v1553 = vunpack.c.l.b16 %v874
        %v1554 = vunpack.c.h.b16 %v874
        %v1555 = vunpack.c.l.b16 %v875
        %v1556 = vunpack.c.h.b16 %v875
        %v1557 = vunpack.c.l.b16 %v876
        %v1558 = vunpack.c.h.b16 %v876
        %v1559 = vunpack.c.l.b16 %v877
        %v1560 = vunpack.c.h.b16 %v877
        %v1561 = vunpack.c.l.b16 %v878
        %v1562 = vunpack.c.h.b16 %v878
        %v1563 = vunpack.c.l.b16 %v879
        %v1564 = vunpack.c.h.b16 %v879
        %v1565 = vunpack.c.l.b16 %v880
        %v1566 = vunpack.c.h.b16 %v880
        %v1567 = vunpack.c.l.b16 %v881
        %v1568 = vunpack.c.h.b16 %v881
        %v1569 = vunpack.c.l.b16 %v882
        %v1570 = vunpack.c.h.b16 %v882
        %v1571 = vunpack.c.l.b16 %v883
        %v1572 = vunpack.c.h.b16 %v883
        %v1573 = vunpack.c.l.b16 %v884
        %v1574 = vunpack.c.h.b16 %v884
        %v1575 = vunpack.c.l.b16 %v885
        %v1576 = vunpack.c.h.b16 %v885
        %v1577 = vunpack.c.l.b16 %v886
        %v1578 = vunpack.c.h.b16 %v886
        %v1579 = vunpack.c.l.b16 %v887
        %v1580 = vunpack.c.h.b16 %v887
        %v1581 = vunpack.c.l.b16 %v888
        %v1582 = vunpack.c.h.b16 %v888
        %v1583 = vunpack.c.l.b16 %v889
        %v1584 = vunpack.c.h.b16 %v889
        %v1585 = vunpack.c.l.b16 %v890
        %v1586 = vunpack.c.h.b16 %v890
        %v1587 = vunpack.c.l.b16 %v891
        %v1588 = vunpack.c.h.b16 %v891
        %v1589 = vunpack.c.l.b16 %v892
        %v1590 = vunpack.c.h.b16 %v892
        %v1591 = vunpack.c.l.b16 %v893
        %v1592 = vunpack.c.h.b16 %v893
        %v1593 = vunpack.c.l.b16 %v894
        %v1594 = vunpack.c.h.b16 %v894
        %v1595 = vunpack.c.l.b16 %v895
        %v1596 = vunpack.c.h.b16 %v895
        %v1597 = vunpack.c.l.b16 %v896
        %v1598 = vunpack.c.h.b16 %v896
        %v1599 = vunpack.c.l.b16 %v897
        %v1600 = vunpack.c.h.b16 %v897
        %v1601 = vunpack.c.l.b16 %v898
        %v1602 = vunpack.c.h.b16 %v898
        %v1603 = vunpack.c.l.b16 %v899
        %v1604 = vunpack.c.h.b16 %v899
        %v1605 = vunpack.c.l.b16 %v900
        %v1606 = vunpack.c.h.b16 %v900
        %v1607 = vunpack.c.l.b16 %v901
        %v1608 = vunpack.c.h.b16 %v901
        %v1609 = vunpack.c.l.b16 %v902
        %v1610 = vunpack.c.h.b16 %v902
        %v1611 = vunpack.c.l.b16 %v903
        %v1612 = vunpack.c.h.b16 %v903
        %v1613 = vunpack.c.l.b16 %v904
        %v1614 = vunpack.c.h.b16 %v904
        %v1615 = vunpack.c.l.b16 %v905
        %v1616 = vunpack.c.h.b16 %v905
        %v1617 = vunpack.c.l.b16 %v906
        %v1618 = vunpack.c.h.b16 %v906
        %v1619 = vunpack.c.l.b16 %v907
        %v1620 = vunpack.c.h.b16 %v907
        %v1621 = vunpack.c.l.b16 %v908
        %v1622 = vunpack.c.h.b16 %v908
        %v1623 = vunpack.c.l.b16 %v909
        %v1624 = vunpack.c.h.b16 %v909
        %v1625 = vunpack.c.l.b16 %v910
        %v1626 = vunpack.c.h.b16 %v910
        %v1627 = vunpack.c.l.b16 %v911
        %v1628 = vunpack.c.h.b16 %v911
        %v1629 = vunpack.c.l.b16 %v912
        %v1630 = vunpack.c.h.b16 %v912
        %v1631 = vunpack.c.l.b16 %v913
        %v1632 = vunpack.c.h.b16 %v913
        %v1633 = vunpack.c.l.b16 %v914
        %v1634 = vunpack.c.h.b16 %v914
        %v1635 = vunpack.c.l.b16 %v915
        %v1636 = vunpack.c.h.b16 %v915
        %v1637 = vunpack.c.l.b16 %v916
        %v1638 = vunpack.c.h.b16 %v916
        %v1639 = vunpack.c.l.b16 %v917
        %v1640 = vunpack.c.h.b16 %v917
        %v1641 = vunpack.c.l.b16 %v918
        %v1642 = vunpack.c.h.b16 %v918
        %v1643 = vunpack.c.l.b16 %v919
        %v1644 = vunpack.c.h.b16 %v919
        %v1645 = vunpack.c.l.b16 %v920
        %v1646 = vunpack.c.h.b16 %v920
        %v1647 = vunpack.c.l.b16 %v921
        %v1648 = vunpack.c.h.b16 %v921
        %v1649 = vunpack.c.l.b16 %v922
        %v1650 = vunpack.c.h.b16 %v922
        %v1651 = vunpack.c.l.b16 %v923
        %v1652 = vunpack.c.h.b16 %v923
        %v1653 = vunpack.c.l.b16 %v924
        %v1654 = vunpack.c.h.b16 %v924
        %v1655 = vunpack.c.l.b16 %v925
        %v1656 = vunpack.c.h.b16 %v925
        %v1657 = vunpack.c.l.b16 %v926
        %v1658 = vunpack.c.h.b16 %v926
        %v1659 = vunpack.c.l.b16 %v927
        %v1660 = vunpack.c.h.b16 %v927
        %v1661 = vunpack.c.l.b16 %v928
        %v1662 = vunpack.c.h.b16 %v928
        %v1663 = vunpack.c.l.b16 %v929
        %v1664 = vunpack.c.h.b16 %v929
        %v1665 = vunpack.c.l.b16 %v930
        %v1666 = vunpack.c.h.b16 %v930
        %v1667 = vunpack.c.l.b16 %v931
        %v1668 = vunpack.c.h.b16 %v931
        %v1669 = vunpack.c.l.b16 %v932
        %v1670 = vunpack.c.h.b16 %v932
        %v1671 = vunpack.c.l.b16 %v933
        %v1672 = vunpack.c.h.b16 %v933
        %v1673 = vunpack.c.l.b16 %v934
        %v1674 = vunpack.c.h.b16 %v934
        %v1675 = vunpack.c.l.b16 %v935
        %v1676 = vunpack.c.h.b16 %v935
        %v1677 = vunpack.c.l.b16 %v936
        %v1678 = vunpack.c.h.b16 %v936
        %v1679 = vunpack.c.l.b16 %v937
        %v1680 = vunpack.c.h.b16 %v937
        %v1681 = vunpack.c.l.b16 %v938
        %v1682 = vunpack.c.h.b16 %v938
        %v1683 = vunpack.c.l.b16 %v939
        %v1684 = vunpack.c.h.b16 %v939
        %v1685 = vunpack.c.l.b16 %v940
        %v1686 = vunpack.c.h.b16 %v940
        %v1687 = vunpack.c.l.b16 %v941
        %v1688 = vunpack.c.h.b16 %v941
        %v1689 = vunpack.c.l.b16 %v942
        %v1690 = vunpack.c.h.b16 %v942
        %v1691 = vunpack.c.l.b16 %v943
        %v1692 = vunpack.c.h.b16 %v943
        %v1693 = vunpack.c.l.b16 %v944
        %v1694 = vunpack.c.h.b16 %v944
        %v1695 = vunpack.c.l.b16 %v945
        %v1696 = vunpack.c.h.b16 %v945
        %v1697 = vunpack.c.l.b16 %v946
        %v1698 = vunpack.c.h.b16 %v946
        %v1699 = vunpack.c.l.b16 %v947
        %v1700 = vunpack.c.h.b16 %v947
        %v1701 = vunpack.c.l.b16 %v948
        %v1702 = vunpack.c.h.b16 %v948
        %v1703 = vunpack.c.l.b16 %v949
        %v1704 = vunpack.c.h.b16 %v949
        %v1705 = vunpack.c.l.b16 %v950
        %v1706 = vunpack.c.h.b16 %v950
        %v1707 = vunpack.c.l.b16 %v951
        %v1708 = vunpack.c.h.b16 %v951
        %v1709 = vunpack.c.l.b16 %v952
        %v1710 = vunpack.c.h.b16 %v952
        %v1711 = vunpack.c.l.b16 %v953
        %v1712 = vunpack.c.h.b16 %v953
        %v1713 = vunpack.c.l.b16 %v954
        %v1714 = vunpack.c.h.b16 %v954
        %v1715 = vunpack.c.l.b16 %v955
        %v1716 = vunpack.c.h.b16 %v955
        %v1717 = vunpack.c.l.b16 %v956
        %v1718 = vunpack.c.h.b16 %v956
        %v1719 = vunpack.c.l.b16 %v957
        %v1720 = vunpack.c.h.b16 %v957
        %v1721 = vunpack.c.l.b16 %v958
        %v1722 = vunpack.c.h.b16 %v958
        %v1723 = vunpack.c.l.b16 %v959
        %v1724 = vunpack.c.h.b16 %v959
        %v1725 = vunpack.c.l.b16 %v960
        %v1726 = vunpack.c.h.b16 %v960
        %v1727 = vunpack.c.l.b16 %v961
        %v1728 = vunpack.c.h.b16 %v961
        %v1729 = vunpack.c.l.b16 %v962
        %v1730 = vunpack.c.h.b16 %v962
        %v1731 = vunpack.c.l.b16 %v963
        %v1732 = vunpack.c.h.b16 %v963
        %v1733 = vunpack.c.l.b16 %v964
        %v1734 = vunpack.c.h.b16 %v964
        %v1735 = vunpack.c.l.b16 %v965
        %v1736 = vunpack.c.h.b16 %v965
        %v1737 = vunpack.c.l.b16 %v966
        %v1738 = vunpack.c.h.b16 %v966
        %v1739 = vunpack.c.l.b16 %v967
        %v1740 = vunpack.c.h.b16 %v967
        %v1741 = vunpack.c.l.b16 %v968
        %v1742 = vunpack.c.h.b16 %v968
        %v1743 = vunpack.c.l.b16 %v969
        %v1744 = vunpack.c.h.b16 %v969
        %v1745 = vunpack.c.l.b16 %v970
        %v1746 = vunpack.c.h.b16 %v970
        %v1747 = vunpack.c.l.b16 %v971
        %v1748 = vunpack.c.h.b16 %v971
        %v1749 = vunpack.c.l.b16 %v972
        %v1750 = vunpack.c.h.b16 %v972
        %v1751 = vunpack.c.l.b16 %v973
        %v1752 = vunpack.c.h.b16 %v973
        %v1753 = vunpack.c.l.b16 %v974
        %v1754 = vunpack.c.h.b16 %v974
        %v1755 = vunpack.c.l.b16 %v975
        %v1756 = vunpack.c.h.b16 %v975
        %v1757 = vunpack.c.l.b16 %v976
        %v1758 = vunpack.c.h.b16 %v976
        %v1759 = vunpack.c.l.b16 %v977
        %v1760 = vunpack.c.h.b16 %v977
        %v1761 = vunpack.c.l.b16 %v978
        %v1762 = vunpack.c.h.b16 %v978
        %v1763 = vunpack.c.l.b16 %v979
        %v1764 = vunpack.c.h.b16 %v979
        %v1765 = vunpack.c.l.b16 %v980
        %v1766 = vunpack.c.h.b16 %v980
        %v1767 = vunpack.c.l.b16 %v981
        %v1768 = vunpack.c.h.b16 %v981
        %v1769 = vunpack.c.l.b16 %v982
        %v1770 = vunpack.c.h.b16 %v982
        %v1771 = vunpack.c.l.b16 %v983
        %v1772 = vunpack.c.h.b16 %v983
        %v1773 = vunpack.c.l.b16 %v984
        %v1774 = vunpack.c.h.b16 %v984
        %v1775 = vunpack.c.l.b16 %v985
        %v1776 = vunpack.c.h.b16 %v985
        %v1777 = vunpack.c.l.b16 %v986
        %v1778 = vunpack.c.h.b16 %v986
        %v1779 = vunpack.c.l.b16 %v987
        %v1780 = vunpack.c.h.b16 %v987
        %v1781 = vunpack.c.l.b16 %v988
        %v1782 = vunpack.c.h.b16 %v988
        %v1783 = vunpack.c.l.b16 %v989
        %v1784 = vunpack.c.h.b16 %v989
        %v1785 = vunpack.c.l.b16 %v990
        %v1786 = vunpack.c.h.b16 %v990
        %v1787 = vunpack.c.l.b16 %v991
        %v1788 = vunpack.c.h.b16 %v991
        %v1789 = vunpack.c.l.b16 %v992
        %v1790 = vunpack.c.h.b16 %v992
        %v1791 = vunpack.c.l.b16 %v993
        %v1792 = vunpack.c.h.b16 %v993
        %v1793 = vunpack.c.l.b16 %v994
        %v1794 = vunpack.c.h.b16 %v994
        %v1795 = vunpack.c.l.b16 %v995
        %v1796 = vunpack.c.h.b16 %v995
        %v1797 = vunpack.c.l.b16 %v996
        %v1798 = vunpack.c.h.b16 %v996
        %v1799 = vunpack.c.l.b16 %v997
        %v1800 = vunpack.c.h.b16 %v997
        %v1801 = vunpack.c.l.b16 %v998
        %v1802 = vunpack.c.h.b16 %v998
        %v1803 = vunpack.c.l.b16 %v999
        %v1804 = vunpack.c.h.b16 %v999
        %v1805 = vunpack.c.l.b16 %v1000
        %v1806 = vunpack.c.h.b16 %v1000
        %v1807 = vunpack.c.l.b16 %v1001
        %v1808 = vunpack.c.h.b16 %v1001
        %v1809 = vunpack.c.l.b16 %v1002
        %v1810 = vunpack.c.h.b16 %v1002
        %v1811 = vpack.c.b16 %v1303, %v1299
        %v1812 = vpack.c.b16 %v1304, %v1300
        %v1813 = vpack.c.b16 %v1305, %v1301
        %v1814 = vpack.c.b16 %v1306, %v1302
        %v1815 = vpack.c.b16 %v1311, %v1307
        %v1816 = vpack.c.b16 %v1312, %v1308
        %v1817 = vpack.c.b16 %v1313, %v1309
        %v1818 = vpack.c.b16 %v1314, %v1310
        %v1819 = vpack.c.b16 %v1319, %v1315
        %v1820 = vpack.c.b16 %v1320, %v1316
        %v1821 = vpack.c.b16 %v1321, %v1317
        %v1822 = vpack.c.b16 %v1322, %v1318
        %v1823 = vpack.c.b16 %v1327, %v1323
        %v1824 = vpack.c.b16 %v1328, %v1324
        %v1825 = vpack.c.b16 %v1329, %v1325
        %v1826 = vpack.c.b16 %v1330, %v1326
        %v1827 = vpack.c.b16 %v1335, %v1331
        %v1828 = vpack.c.b16 %v1336, %v1332
        %v1829 = vpack.c.b16 %v1337, %v1333
        %v1830 = vpack.c.b16 %v1338, %v1334
        %v1831 = vpack.c.b16 %v1343, %v1339
        %v1832 = vpack.c.b16 %v1344, %v1340
        %v1833 = vpack.c.b16 %v1345, %v1341
        %v1834 = vpack.c.b16 %v1346, %v1342
        %v1835 = vpack.c.b16 %v1351, %v1347
        %v1836 = vpack.c.b16 %v1352, %v1348
        %v1837 = vpack.c.b16 %v1353, %v1349
        %v1838 = vpack.c.b16 %v1354, %v1350
        %v1839 = vpack.c.b16 %v1359, %v1355
        %v1840 = vpack.c.b16 %v1360, %v1356
        %v1841 = vpack.c.b16 %v1361, %v1357
        %v1842 = vpack.c.b16 %v1362, %v1358
        %v1843 = vpack.c.b16 %v1367, %v1363
        %v1844 = vpack.c.b16 %v1368, %v1364
        %v1845 = vpack.c.b16 %v1369, %v1365
        %v1846 = vpack.c.b16 %v1370, %v1366
        %v1847 = vpack.c.b16 %v1375, %v1371
        %v1848 = vpack.c.b16 %v1376, %v1372
        %v1849 = vpack.c.b16 %v1377, %v1373
        %v1850 = vpack.c.b16 %v1378, %v1374
        %v1851 = vpack.c.b16 %v1383, %v1379
        %v1852 = vpack.c.b16 %v1384, %v1380
        %v1853 = vpack.c.b16 %v1385, %v1381
        %v1854 = vpack.c.b16 %v1386, %v1382
        %v1855 = vpack.c.b16 %v1391, %v1387
        %v1856 = vpack.c.b16 %v1392, %v1388
        %v1857 = vpack.c.b16 %v1393, %v1389
        %v1858 = vpack.c.b16 %v1394, %v1390
        %v1859 = vpack.c.b16 %v1399, %v1395
        %v1860 = vpack.c.b16 %v1400, %v1396
        %v1861 = vpack.c.b16 %v1401, %v1397
        %v1862 = vpack.c.b16 %v1402, %v1398
        %v1863 = vpack.c.b16 %v1407, %v1403
        %v1864 = vpack.c.b16 %v1408, %v1404
        %v1865 = vpack.c.b16 %v1409, %v1405
        %v1866 = vpack.c.b16 %v1410, %v1406
        %v1867 = vpack.c.b16 %v1415, %v1411
        %v1868 = vpack.c.b16 %v1416, %v1412
        %v1869 = vpack.c.b16 %v1417, %v1413
        %v1870 = vpack.c.b16 %v1418, %v1414
        %v1871 = vpack.c.b16 %v1423, %v1419
        %v1872 = vpack.c.b16 %v1424, %v1420
        %v1873 = vpack.c.b16 %v1425, %v1421
        %v1874 = vpack.c.b16 %v1426, %v1422
        %v1875 = vpack.c.b16 %v1431, %v1427
        %v1876 = vpack.c.b16 %v1432, %v1428
        %v1877 = vpack.c.b16 %v1433, %v1429
        %v1878 = vpack.c.b16 %v1434, %v1430
        %v1879 = vpack.c.b16 %v1439, %v1435
        %v1880 = vpack.c.b16 %v1440, %v1436
        %v1881 = vpack.c.b16 %v1441, %v1437
        %v1882 = vpack.c.b16 %v1442, %v1438
        %v1883 = vpack.c.b16 %v1447, %v1443
        %v1884 = vpack.c.b16 %v1448, %v1444
        %v1885 = vpack.c.b16 %v1449, %v1445
        %v1886 = vpack.c.b16 %v1450, %v1446
        %v1887 = vpack.c.b16 %v1455, %v1451
        %v1888 = vpack.c.b16 %v1456, %v1452
        %v1889 = vpack.c.b16 %v1457, %v1453
        %v1890 = vpack.c.b16 %v1458, %v1454
        %v1891 = vpack.c.b16 %v1463, %v1459
        %v1892 = vpack.c.b16 %v1464, %v1460
        %v1893 = vpack.c.b16 %v1465, %v1461
        %v1894 = vpack.c.b16 %v1466, %v1462
        %v1895 = vpack.c.b16 %v1471, %v1467
        %v1896 = vpack.c.b16 %v1472, %v1468
        %v1897 = vpack.c.b16 %v1473, %v1469
        %v1898 = vpack.c.b16 %v1474, %v1470
        %v1899 = vpack.c.b16 %v1479, %v1475
        %v1900 = vpack.c.b16 %v1480, %v1476
        %v1901 = vpack.c.b16 %v1481, %v1477
        %v1902 = vpack.c.b16 %v1482, %v1478
        %v1903 = vpack.c.b16 %v1487, %v1483
        %v1904 = vpack.c.b16 %v1488, %v1484
        %v1905 = vpack.c.b16 %v1489, %v1485
        %v1906 = vpack.c.b16 %v1490, %v1486
        %v1907 = vpack.c.b16 %v1495, %v1491
        %v1908 = vpack.c.b16 %v1496, %v1492
        %v1909 = vpack.c.b16 %v1497, %v1493
        %v1910 = vpack.c.b16 %v1498, %v1494
        %v1911 = vpack.c.b16 %v1503, %v1499
        %v1912 = vpack.c.b16 %v1504, %v1500
        %v1913 = vpack.c.b16 %v1505, %v1501
        %v1914 = vpack.c.b16 %v1506, %v1502
        %v1915 = vpack.c.b16 %v1511, %v1507
        %v1916 = vpack.c.b16 %v1512, %v1508
        %v1917 = vpack.c.b16 %v1513, %v1509
        %v1918 = vpack.c.b16 %v1514, %v1510
        %v1919 = vpack.c.b16 %v1519, %v1515
        %v1920 = vpack.c.b16 %v1520, %v1516
        %v1921 = vpack.c.b16 %v1521, %v1517
        %v1922 = vpack.c.b16 %v1522, %v1518
        %v1923 = vpack.c.b16 %v1527, %v1523
        %v1924 = vpack.c.b16 %v1528, %v1524
        %v1925 = vpack.c.b16 %v1529, %v1525
        %v1926 = vpack.c.b16 %v1530, %v1526
        %v1927 = vpack.c.b16 %v1535, %v1531
        %v1928 = vpack.c.b16 %v1536, %v1532
        %v1929 = vpack.c.b16 %v1537, %v1533
        %v1930 = vpack.c.b16 %v1538, %v1534
        %v1931 = vpack.c.b16 %v1543, %v1539
        %v1932 = vpack.c.b16 %v1544, %v1540
        %v1933 = vpack.c.b16 %v1545, %v1541
        %v1934 = vpack.c.b16 %v1546, %v1542
        %v1935 = vpack.c.b16 %v1551, %v1547
        %v1936 = vpack.c.b16 %v1552, %v1548
        %v1937 = vpack.c.b16 %v1553, %v1549
        %v1938 = vpack.c.b16 %v1554, %v1550
        %v1939 = vpack.c.b16 %v1559, %v1555
        %v1940 = vpack.c.b16 %v1560, %v1556
        %v1941 = vpack.c.b16 %v1561, %v1557
        %v1942 = vpack.c.b16 %v1562, %v1558
        %v1943 = vpack.c.b16 %v1567, %v1563
        %v1944 = vpack.c.b16 %v1568, %v1564
        %v1945 = vpack.c.b16 %v1569, %v1565
        %v1946 = vpack.c.b16 %v1570, %v1566
        %v1947 = vpack.c.b16 %v1575, %v1571
        %v1948 = vpack.c.b16 %v1576, %v1572
        %v1949 = vpack.c.b16 %v1577, %v1573
        %v1950 = vpack.c.b16 %v1578, %v1574
        %v1951 = vpack.c.b16 %v1583, %v1579
        %v1952 = vpack.c.b16 %v1584, %v1580
        %v1953 = vpack.c.b16 %v1585, %v1581
        %v1954 = vpack.c.b16 %v1586, %v1582
        %v1955 = vpack.c.b16 %v1591, %v1587
        %v1956 = vpack.c.b16 %v1592, %v1588
        %v1957 = vpack.c.b16 %v1593, %v1589
        %v1958 = vpack.c.b16 %v1594, %v1590
        %v1959 = vpack.c.b16 %v1599, %v1595
        %v1960 = vpack.c.b16 %v1600, %v1596
        %v1961 = vpack.c.b16 %v1601, %v1597
        %v1962 = vpack.c.b16 %v1602, %v1598
        %v1963 = vpack.c.b16 %v1607, %v1603
        %v1964 = vpack.c.b16 %v1608, %v1604
        %v1965 = vpack.c.b16 %v1609, %v1605
        %v1966 = vpack.c.b16 %v1610, %v1606
        %v1967 = vpack.c.b16 %v1615, %v1611
        %v1968 = vpack.c.b16 %v1616, %v1612
        %v1969 = vpack.c.b16 %v1617, %v1613
        %v1970 = vpack.c.b16 %v1618, %v1614
        %v1971 = vpack.c.b16 %v1623, %v1619
        %v1972 = vpack.c.b16 %v1624, %v1620
        %v1973 = vpack.c.b16 %v1625, %v1621
        %v1974 = vpack.c.b16 %v1626, %v1622
        %v1975 = vpack.c.b16 %v1631, %v1627
        %v1976 = vpack.c.b16 %v1632, %v1628
        %v1977 = vpack.c.b16 %v1633, %v1629
        %v1978 = vpack.c.b16 %v1634, %v1630
        %v1979 = vpack.c.b16 %v1639, %v1635
        %v1980 = vpack.c.b16 %v1640, %v1636
        %v1981 = vpack.c.b16 %v1641, %v1637
        %v1982 = vpack.c.b16 %v1642, %v1638
        %v1983 = vpack.c.b16 %v1647, %v1643
        %v1984 = vpack.c.b16 %v1648, %v1644
        %v1985 = vpack.c.b16 %v1649, %v1645
        %v1986 = vpack.c.b16 %v1650, %v1646
        %v1987 = vpack.c.b16 %v1655, %v1651
        %v1988 = vpack.c.b16 %v1656, %v1652
        %v1989 = vpack.c.b16 %v1657, %v1653
        %v1990 = vpack.c.b16 %v1658, %v1654
        %v1991 = vpack.c.b16 %v1663, %v1659
        %v1992 = vpack.c.b16 %v1664, %v1660
        %v1993 = vpack.c.b16 %v1665, %v1661
        %v1994 = vpack.c.b16 %v1666, %v1662
        %v1995 = vpack.c.b16 %v1671, %v1667
        %v1996 = vpack.c.b16 %v1672, %v1668
        %v1997 = vpack.c.b16 %v1673, %v1669
        %v1998 = vpack.c.b16 %v1674, %v1670
        %v1999 = vpack.c.b16 %v1679, %v1675
        %v2000 = vpack.c.b16 %v1680, %v1676
        %v2001 = vpack.c.b16 %v1681, %v1677
        %v2002 = vpack.c.b16 %v1682, %v1678
        %v2003 = vpack.c.b16 %v1687, %v1683
        %v2004 = vpack.c.b16 %v1688, %v1684
        %v2005 = vpack.c.b16 %v1689, %v1685
        %v2006 = vpack.c.b16 %v1690, %v1686
        %v2007 = vpack.c.b16 %v1695, %v1691
        %v2008 = vpack.c.b16 %v1696, %v1692
        %v2009 = vpack.c.b16 %v1697, %v1693
        %v2010 = vpack.c.b16 %v1698, %v1694
        %v2011 = vpack.c.b16 %v1703, %v1699
        %v2012 = vpack.c.b16 %v1704, %v1700
        %v2013 = vpack.c.b16 %v1705, %v1701
        %v2014 = vpack.c.b16 %v1706, %v1702
        %v2015 = vpack.c.b16 %v1711, %v1707
        %v2016 = vpack.c.b16 %v1712, %v1708
        %v2017 = vpack.c.b16 %v1713, %v1709
        %v2018 = vpack.c.b16 %v1714, %v1710
        %v2019 = vpack.c.b16 %v1719, %v1715
        %v2020 = vpack.c.b16 %v1720, %v1716
        %v2021 = vpack.c.b16 %v1721, %v1717
        %v2022 = vpack.c.b16 %v1722, %v1718
        %v2023 = vpack.c.b16 %v1727, %v1723
        %v2024 = vpack.c.b16 %v1728, %v1724
        %v2025 = vpack.c.b16 %v1729, %v1725
        %v2026 = vpack.c.b16 %v1730, %v1726
        %v2027 = vpack.c.b16 %v1735, %v1731
        %v2028 = vpack.c.b16 %v1736, %v1732
        %v2029 = vpack.c.b16 %v1737, %v1733
        %v2030 = vpack.c.b16 %v1738, %v1734
        %v2031 = vpack.c.b16 %v1743, %v1739
        %v2032 = vpack.c.b16 %v1744, %v1740
        %v2033 = vpack.c.b16 %v1745, %v1741
        %v2034 = vpack.c.b16 %v1746, %v1742
        %v2035 = vpack.c.b16 %v1751, %v1747
        %v2036 = vpack.c.b16 %v1752, %v1748
        %v2037 = vpack.c.b16 %v1753, %v1749
        %v2038 = vpack.c.b16 %v1754, %v1750
        %v2039 = vpack.c.b16 %v1759, %v1755
        %v2040 = vpack.c.b16 %v1760, %v1756
        %v2041 = vpack.c.b16 %v1761, %v1757
        %v2042 = vpack.c.b16 %v1762, %v1758
        %v2043 = vpack.c.b16 %v1767, %v1763
        %v2044 = vpack.c.b16 %v1768, %v1764
        %v2045 = vpack.c.b16 %v1769, %v1765
        %v2046 = vpack.c.b16 %v1770, %v1766
        %v2047 = vpack.c.b16 %v1775, %v1771
        %v2048 = vpack.c.b16 %v1776, %v1772
        %v2049 = vpack.c.b16 %v1777, %v1773
        %v2050 = vpack.c.b16 %v1778, %v1774
        %v2051 = vpack.c.b16 %v1783, %v1779
        %v2052 = vpack.c.b16 %v1784, %v1780
        %v2053 = vpack.c.b16 %v1785, %v1781
        %v2054 = vpack.c.b16 %v1786, %v1782
        %v2055 = vpack.c.b16 %v1791, %v1787
        %v2056 = vpack.c.b16 %v1792, %v1788
        %v2057 = vpack.c.b16 %v1793, %v1789
        %v2058 = vpack.c.b16 %v1794, %v1790
        %v2059 = vpack.c.b16 %v1799, %v1795
        %v2060 = vpack.c.b16 %v1800, %v1796
        %v2061 = vpack.c.b16 %v1801, %v1797
        %v2062 = vpack.c.b16 %v1802, %v1798
        %v2063 = vpack.c.b16 %v1807, %v1803
        %v2064 = vpack.c.b16 %v1808, %v1804
        %v2065 = vpack.c.b16 %v1809, %v1805
        %v2066 = vpack.c.b16 %v1810, %v1806
        %2323 = vmatprep.subr.bf16.mxu0 %v1812
        %2324 = vmatpush1.bf16.msra.mxu0 %v1811
        %2325 = vmatprep.subr.bf16.mxu0 %v1816
        %2326 = vmatpush1.bf16.msra.mxu0 %v1815
        %2327 = vmatprep.subr.bf16.mxu0 %v1820
        %2328 = vmatpush1.bf16.msra.mxu0 %v1819
        %2329 = vmatprep.subr.bf16.mxu0 %v1824
        %2330 = vmatpush1.bf16.msra.mxu0 %v1823
        %2331 = vmatprep.subr.bf16.mxu0 %v1828
        %2332 = vmatpush1.bf16.msra.mxu0 %v1827
        %2333 = vmatprep.subr.bf16.mxu0 %v1832
        %2334 = vmatpush1.bf16.msra.mxu0 %v1831
        %2335 = vmatprep.subr.bf16.mxu0 %v1836
        %2336 = vmatpush1.bf16.msra.mxu0 %v1835
        %2337 = vmatprep.subr.bf16.mxu0 %v1840
        %2338 = vmatpush1.bf16.msra.mxu0 %v1839
        %2339 = vmatprep.subr.bf16.mxu0 %v1844
        %2340 = vmatpush1.bf16.msra.mxu0 %v1843
        %2341 = vmatprep.subr.bf16.mxu0 %v1848
        %2342 = vmatpush1.bf16.msra.mxu0 %v1847
        %2343 = vmatprep.subr.bf16.mxu0 %v1852
        %2344 = vmatpush1.bf16.msra.mxu0 %v1851
        %2345 = vmatprep.subr.bf16.mxu0 %v1856
        %2346 = vmatpush1.bf16.msra.mxu0 %v1855
        %2347 = vmatprep.subr.bf16.mxu0 %v1860
        %2348 = vmatpush1.bf16.msra.mxu0 %v1859
        %2349 = vmatprep.subr.bf16.mxu0 %v1864
        %2350 = vmatpush1.bf16.msra.mxu0 %v1863
        %2351 = vmatprep.subr.bf16.mxu0 %v1868
        %2352 = vmatpush1.bf16.msra.mxu0 %v1867
        %2353 = vmatprep.subr.bf16.mxu0 %v1872
        %2354 = vmatpush1.bf16.msra.mxu0 %v1871
        %2355 = vmatprep.mubr.bf16.mxu0 %v1028
        %2356 = vmatmul.mubr.bf16.gmra.mrb[0].mxu0 %v1027
        %v2357 = vpop.f32.mrb[0].mxu0
        %v2358 = vadd.f32 0.0, %v2357
        %v2359 = vpop.f32.mrb[0].mxu0
        %v2360 = vadd.f32 0.0, %v2359
        %v2361 = vpop.f32.mrb[0].mxu0
        %v2362 = vadd.f32 0.0, %v2361
        %v2363 = vpop.f32.mrb[0].mxu0
        %v2364 = vadd.f32 0.0, %v2363
        %2365 = vdwg.mxu0
        %2366 = vmatprep.subr.bf16.mxu0 %v1876
        %2367 = vmatpush1.bf16.msra.mxu0 %v1875
        %2368 = vmatprep.subr.bf16.mxu0 %v1880
        %2369 = vmatpush1.bf16.msra.mxu0 %v1879
        %2370 = vmatprep.subr.bf16.mxu0 %v1884
        %2371 = vmatpush1.bf16.msra.mxu0 %v1883
        %2372 = vmatprep.subr.bf16.mxu0 %v1888
        %2373 = vmatpush1.bf16.msra.mxu0 %v1887
        %2374 = vmatprep.subr.bf16.mxu0 %v1892
        %2375 = vmatpush1.bf16.msra.mxu0 %v1891
        %2376 = vmatprep.subr.bf16.mxu0 %v1896
        %2377 = vmatpush1.bf16.msra.mxu0 %v1895
        %2378 = vmatprep.subr.bf16.mxu0 %v1900
        %2379 = vmatpush1.bf16.msra.mxu0 %v1899
        %2380 = vmatprep.subr.bf16.mxu0 %v1904
        %2381 = vmatpush1.bf16.msra.mxu0 %v1903
        %2382 = vmatprep.subr.bf16.mxu0 %v1908
        %2383 = vmatpush1.bf16.msra.mxu0 %v1907
        %2384 = vmatprep.subr.bf16.mxu0 %v1912
        %2385 = vmatpush1.bf16.msra.mxu0 %v1911
        %2386 = vmatprep.subr.bf16.mxu0 %v1916
        %2387 = vmatpush1.bf16.msra.mxu0 %v1915
        %2388 = vmatprep.subr.bf16.mxu0 %v1920
        %2389 = vmatpush1.bf16.msra.mxu0 %v1919
        %2390 = vmatprep.subr.bf16.mxu0 %v1924
        %2391 = vmatpush1.bf16.msra.mxu0 %v1923
        %2392 = vmatprep.subr.bf16.mxu0 %v1928
        %2393 = vmatpush1.bf16.msra.mxu0 %v1927
        %2394 = vmatprep.subr.bf16.mxu0 %v1932
        %2395 = vmatpush1.bf16.msra.mxu0 %v1931
        %2396 = vmatprep.subr.bf16.mxu0 %v1936
        %2397 = vmatpush1.bf16.msra.mxu0 %v1935
        %2398 = vmatprep.mubr.bf16.mxu0 %v1030
        %2399 = vmatmul.mubr.bf16.gmra.mrb[0].mxu0 %v1029
        %v2400 = vpop.f32.mrb[0].mxu0
        %v2401 = vadd.f32 %v2358, %v2400
        %v2402 = vpop.f32.mrb[0].mxu0
        %v2403 = vadd.f32 %v2360, %v2402
        %v2404 = vpop.f32.mrb[0].mxu0
        %v2405 = vadd.f32 %v2362, %v2404
        %v2406 = vpop.f32.mrb[0].mxu0
        %v2407 = vadd.f32 %v2364, %v2406
        %2408 = vdwg.mxu0
        %2409 = vmatprep.subr.bf16.mxu0 %v1940
        %2410 = vmatpush1.bf16.msra.mxu0 %v1939
        %2411 = vmatprep.subr.bf16.mxu0 %v1944
        %2412 = vmatpush1.bf16.msra.mxu0 %v1943
        %2413 = vmatprep.subr.bf16.mxu0 %v1948
        %2414 = vmatpush1.bf16.msra.mxu0 %v1947
        %2415 = vmatprep.subr.bf16.mxu0 %v1952
        %2416 = vmatpush1.bf16.msra.mxu0 %v1951
        %2417 = vmatprep.subr.bf16.mxu0 %v1956
        %2418 = vmatpush1.bf16.msra.mxu0 %v1955
        %2419 = vmatprep.subr.bf16.mxu0 %v1960
        %2420 = vmatpush1.bf16.msra.mxu0 %v1959
        %2421 = vmatprep.subr.bf16.mxu0 %v1964
        %2422 = vmatpush1.bf16.msra.mxu0 %v1963
        %2423 = vmatprep.subr.bf16.mxu0 %v1968
        %2424 = vmatpush1.bf16.msra.mxu0 %v1967
        %2425 = vmatprep.subr.bf16.mxu0 %v1972
        %2426 = vmatpush1.bf16.msra.mxu0 %v1971
        %2427 = vmatprep.subr.bf16.mxu0 %v1976
        %2428 = vmatpush1.bf16.msra.mxu0 %v1975
        %2429 = vmatprep.subr.bf16.mxu0 %v1980
        %2430 = vmatpush1.bf16.msra.mxu0 %v1979
        %2431 = vmatprep.subr.bf16.mxu0 %v1984
        %2432 = vmatpush1.bf16.msra.mxu0 %v1983
        %2433 = vmatprep.subr.bf16.mxu0 %v1988
        %2434 = vmatpush1.bf16.msra.mxu0 %v1987
        %2435 = vmatprep.subr.bf16.mxu0 %v1992
        %2436 = vmatpush1.bf16.msra.mxu0 %v1991
        %2437 = vmatprep.subr.bf16.mxu0 %v1996
        %2438 = vmatpush1.bf16.msra.mxu0 %v1995
        %2439 = vmatprep.subr.bf16.mxu0 %v2000
        %2440 = vmatpush1.bf16.msra.mxu0 %v1999
        %2441 = vmatprep.mubr.bf16.mxu0 %v1032
        %2442 = vmatmul.mubr.bf16.gmra.mrb[0].mxu0 %v1031
        %v2443 = vpop.f32.mrb[0].mxu0
        %v2444 = vadd.f32 %v2401, %v2443
        %v2445 = vpop.f32.mrb[0].mxu0
        %v2446 = vadd.f32 %v2403, %v2445
        %v2447 = vpop.f32.mrb[0].mxu0
        %v2448 = vadd.f32 %v2405, %v2447
        %v2449 = vpop.f32.mrb[0].mxu0
        %v2450 = vadd.f32 %v2407, %v2449
        %2451 = vdwg.mxu0
        %2452 = vmatprep.subr.bf16.mxu0 %v2004
        %2453 = vmatpush1.bf16.msra.mxu0 %v2003
        %2454 = vmatprep.subr.bf16.mxu0 %v2008
        %2455 = vmatpush1.bf16.msra.mxu0 %v2007
        %2456 = vmatprep.subr.bf16.mxu0 %v2012
        %2457 = vmatpush1.bf16.msra.mxu0 %v2011
        %2458 = vmatprep.subr.bf16.mxu0 %v2016
        %2459 = vmatpush1.bf16.msra.mxu0 %v2015
        %2460 = vmatprep.subr.bf16.mxu0 %v2020
        %2461 = vmatpush1.bf16.msra.mxu0 %v2019
        %2462 = vmatprep.subr.bf16.mxu0 %v2024
        %2463 = vmatpush1.bf16.msra.mxu0 %v2023
        %2464 = vmatprep.subr.bf16.mxu0 %v2028
        %2465 = vmatpush1.bf16.msra.mxu0 %v2027
        %2466 = vmatprep.subr.bf16.mxu0 %v2032
        %2467 = vmatpush1.bf16.msra.mxu0 %v2031
        %2468 = vmatprep.subr.bf16.mxu0 %v2036
        %2469 = vmatpush1.bf16.msra.mxu0 %v2035
        %2470 = vmatprep.subr.bf16.mxu0 %v2040
        %2471 = vmatpush1.bf16.msra.mxu0 %v2039
        %2472 = vmatprep.subr.bf16.mxu0 %v2044
        %2473 = vmatpush1.bf16.msra.mxu0 %v2043
        %2474 = vmatprep.subr.bf16.mxu0 %v2048
        %2475 = vmatpush1.bf16.msra.mxu0 %v2047
        %2476 = vmatprep.subr.bf16.mxu0 %v2052
        %2477 = vmatpush1.bf16.msra.mxu0 %v2051
        %2478 = vmatprep.subr.bf16.mxu0 %v2056
        %2479 = vmatpush1.bf16.msra.mxu0 %v2055
        %2480 = vmatprep.subr.bf16.mxu0 %v2060
        %2481 = vmatpush1.bf16.msra.mxu0 %v2059
        %2482 = vmatprep.subr.bf16.mxu0 %v2064
        %2483 = vmatpush1.bf16.msra.mxu0 %v2063
        %2484 = vmatprep.mubr.bf16.mxu0 %v1034
        %2485 = vmatmul.mubr.bf16.gmra.mrb[0].mxu0 %v1033
        %v2486 = vpop.f32.mrb[0].mxu0
        %v2487 = vadd.f32 %v2444, %v2486
        %v2488 = vpop.f32.mrb[0].mxu0
        %v2489 = vadd.f32 %v2446, %v2488
        %v2490 = vpop.f32.mrb[0].mxu0
        %v2491 = vadd.f32 %v2448, %v2490
        %v2492 = vpop.f32.mrb[0].mxu0
        %v2493 = vadd.f32 %v2450, %v2492
        %2494 = vdwg.mxu0
        %2495 = vmatprep.subr.bf16.mxu0 %v1814
        %2496 = vmatpush1.bf16.msra.mxu0 %v1813
        %2497 = vmatprep.subr.bf16.mxu0 %v1818
        %2498 = vmatpush1.bf16.msra.mxu0 %v1817
        %2499 = vmatprep.subr.bf16.mxu0 %v1822
        %2500 = vmatpush1.bf16.msra.mxu0 %v1821
        %2501 = vmatprep.subr.bf16.mxu0 %v1826
        %2502 = vmatpush1.bf16.msra.mxu0 %v1825
        %2503 = vmatprep.subr.bf16.mxu0 %v1830
        %2504 = vmatpush1.bf16.msra.mxu0 %v1829
        %2505 = vmatprep.subr.bf16.mxu0 %v1834
        %2506 = vmatpush1.bf16.msra.mxu0 %v1833
        %2507 = vmatprep.subr.bf16.mxu0 %v1838
        %2508 = vmatpush1.bf16.msra.mxu0 %v1837
        %2509 = vmatprep.subr.bf16.mxu0 %v1842
        %2510 = vmatpush1.bf16.msra.mxu0 %v1841
        %2511 = vmatprep.subr.bf16.mxu0 %v1846
        %2512 = vmatpush1.bf16.msra.mxu0 %v1845
        %2513 = vmatprep.subr.bf16.mxu0 %v1850
        %2514 = vmatpush1.bf16.msra.mxu0 %v1849
        %2515 = vmatprep.subr.bf16.mxu0 %v1854
        %2516 = vmatpush1.bf16.msra.mxu0 %v1853
        %2517 = vmatprep.subr.bf16.mxu0 %v1858
        %2518 = vmatpush1.bf16.msra.mxu0 %v1857
        %2519 = vmatprep.subr.bf16.mxu0 %v1862
        %2520 = vmatpush1.bf16.msra.mxu0 %v1861
        %2521 = vmatprep.subr.bf16.mxu0 %v1866
        %2522 = vmatpush1.bf16.msra.mxu0 %v1865
        %2523 = vmatprep.subr.bf16.mxu0 %v1870
        %2524 = vmatpush1.bf16.msra.mxu0 %v1869
        %2525 = vmatprep.subr.bf16.mxu0 %v1874
        %2526 = vmatpush1.bf16.msra.mxu0 %v1873
        %2527 = vmatprep.mubr.bf16.mxu0 %v1028
        %2528 = vmatmul.mubr.bf16.gmra.mrb[0].mxu0 %v1027
        %v2529 = vpop.f32.mrb[0].mxu0
        %v2530 = vadd.f32 0.0, %v2529
        %v2531 = vpop.f32.mrb[0].mxu0
        %v2532 = vadd.f32 0.0, %v2531
        %v2533 = vpop.f32.mrb[0].mxu0
        %v2534 = vadd.f32 0.0, %v2533
        %v2535 = vpop.f32.mrb[0].mxu0
        %v2536 = vadd.f32 0.0, %v2535
        %2537 = vdwg.mxu0
        %2538 = vmatprep.subr.bf16.mxu0 %v1878
        %2539 = vmatpush1.bf16.msra.mxu0 %v1877
        %2540 = vmatprep.subr.bf16.mxu0 %v1882
        %2541 = vmatpush1.bf16.msra.mxu0 %v1881
        %2542 = vmatprep.subr.bf16.mxu0 %v1886
        %2543 = vmatpush1.bf16.msra.mxu0 %v1885
        %2544 = vmatprep.subr.bf16.mxu0 %v1890
        %2545 = vmatpush1.bf16.msra.mxu0 %v1889
        %2546 = vmatprep.subr.bf16.mxu0 %v1894
        %2547 = vmatpush1.bf16.msra.mxu0 %v1893
        %2548 = vmatprep.subr.bf16.mxu0 %v1898
        %2549 = vmatpush1.bf16.msra.mxu0 %v1897
        %2550 = vmatprep.subr.bf16.mxu0 %v1902
        %2551 = vmatpush1.bf16.msra.mxu0 %v1901
        %2552 = vmatprep.subr.bf16.mxu0 %v1906
        %2553 = vmatpush1.bf16.msra.mxu0 %v1905
        %2554 = vmatprep.subr.bf16.mxu0 %v1910
        %2555 = vmatpush1.bf16.msra.mxu0 %v1909
        %2556 = vmatprep.subr.bf16.mxu0 %v1914
        %2557 = vmatpush1.bf16.msra.mxu0 %v1913
        %2558 = vmatprep.subr.bf16.mxu0 %v1918
        %2559 = vmatpush1.bf16.msra.mxu0 %v1917
        %2560 = vmatprep.subr.bf16.mxu0 %v1922
        %2561 = vmatpush1.bf16.msra.mxu0 %v1921
        %2562 = vmatprep.subr.bf16.mxu0 %v1926
        %2563 = vmatpush1.bf16.msra.mxu0 %v1925
        %2564 = vmatprep.subr.bf16.mxu0 %v1930
        %2565 = vmatpush1.bf16.msra.mxu0 %v1929
        %2566 = vmatprep.subr.bf16.mxu0 %v1934
        %2567 = vmatpush1.bf16.msra.mxu0 %v1933
        %2568 = vmatprep.subr.bf16.mxu0 %v1938
        %2569 = vmatpush1.bf16.msra.mxu0 %v1937
        %2570 = vmatprep.mubr.bf16.mxu0 %v1030
        %2571 = vmatmul.mubr.bf16.gmra.mrb[0].mxu0 %v1029
        %v2572 = vpop.f32.mrb[0].mxu0
        %v2573 = vadd.f32 %v2530, %v2572
        %v2574 = vpop.f32.mrb[0].mxu0
        %v2575 = vadd.f32 %v2532, %v2574
        %v2576 = vpop.f32.mrb[0].mxu0
        %v2577 = vadd.f32 %v2534, %v2576
        %v2578 = vpop.f32.mrb[0].mxu0
        %v2579 = vadd.f32 %v2536, %v2578
        %2580 = vdwg.mxu0
        %2581 = vmatprep.subr.bf16.mxu0 %v1942
        %2582 = vmatpush1.bf16.msra.mxu0 %v1941
        %2583 = vmatprep.subr.bf16.mxu0 %v1946
        %2584 = vmatpush1.bf16.msra.mxu0 %v1945
        %2585 = vmatprep.subr.bf16.mxu0 %v1950
        %2586 = vmatpush1.bf16.msra.mxu0 %v1949
        %2587 = vmatprep.subr.bf16.mxu0 %v1954
        %2588 = vmatpush1.bf16.msra.mxu0 %v1953
        %2589 = vmatprep.subr.bf16.mxu0 %v1958
        %2590 = vmatpush1.bf16.msra.mxu0 %v1957
        %2591 = vmatprep.subr.bf16.mxu0 %v1962
        %2592 = vmatpush1.bf16.msra.mxu0 %v1961
        %2593 = vmatprep.subr.bf16.mxu0 %v1966
        %2594 = vmatpush1.bf16.msra.mxu0 %v1965
        %2595 = vmatprep.subr.bf16.mxu0 %v1970
        %2596 = vmatpush1.bf16.msra.mxu0 %v1969
        %2597 = vmatprep.subr.bf16.mxu0 %v1974
        %2598 = vmatpush1.bf16.msra.mxu0 %v1973
        %2599 = vmatprep.subr.bf16.mxu0 %v1978
        %2600 = vmatpush1.bf16.msra.mxu0 %v1977
        %2601 = vmatprep.subr.bf16.mxu0 %v1982
        %2602 = vmatpush1.bf16.msra.mxu0 %v1981
        %2603 = vmatprep.subr.bf16.mxu0 %v1986
        %2604 = vmatpush1.bf16.msra.mxu0 %v1985
        %2605 = vmatprep.subr.bf16.mxu0 %v1990
        %2606 = vmatpush1.bf16.msra.mxu0 %v1989
        %2607 = vmatprep.subr.bf16.mxu0 %v1994
        %2608 = vmatpush1.bf16.msra.mxu0 %v1993
        %2609 = vmatprep.subr.bf16.mxu0 %v1998
        %2610 = vmatpush1.bf16.msra.mxu0 %v1997
        %2611 = vmatprep.subr.bf16.mxu0 %v2002
        %2612 = vmatpush1.bf16.msra.mxu0 %v2001
        %2613 = vmatprep.mubr.bf16.mxu0 %v1032
        %2614 = vmatmul.mubr.bf16.gmra.mrb[0].mxu0 %v1031
        %v2615 = vpop.f32.mrb[0].mxu0
        %v2616 = vadd.f32 %v2573, %v2615
        %v2617 = vpop.f32.mrb[0].mxu0
        %v2618 = vadd.f32 %v2575, %v2617
        %v2619 = vpop.f32.mrb[0].mxu0
        %v2620 = vadd.f32 %v2577, %v2619
        %v2621 = vpop.f32.mrb[0].mxu0
        %v2622 = vadd.f32 %v2579, %v2621
        %2623 = vdwg.mxu0
        %2624 = vmatprep.subr.bf16.mxu0 %v2006
        %2625 = vmatpush1.bf16.msra.mxu0 %v2005
        %2626 = vmatprep.subr.bf16.mxu0 %v2010
        %2627 = vmatpush1.bf16.msra.mxu0 %v2009
        %2628 = vmatprep.subr.bf16.mxu0 %v2014
        %2629 = vmatpush1.bf16.msra.mxu0 %v2013
        %2630 = vmatprep.subr.bf16.mxu0 %v2018
        %2631 = vmatpush1.bf16.msra.mxu0 %v2017
        %2632 = vmatprep.subr.bf16.mxu0 %v2022
        %2633 = vmatpush1.bf16.msra.mxu0 %v2021
        %2634 = vmatprep.subr.bf16.mxu0 %v2026
        %2635 = vmatpush1.bf16.msra.mxu0 %v2025
        %2636 = vmatprep.subr.bf16.mxu0 %v2030
        %2637 = vmatpush1.bf16.msra.mxu0 %v2029
        %2638 = vmatprep.subr.bf16.mxu0 %v2034
        %2639 = vmatpush1.bf16.msra.mxu0 %v2033
        %2640 = vmatprep.subr.bf16.mxu0 %v2038
        %2641 = vmatpush1.bf16.msra.mxu0 %v2037
        %2642 = vmatprep.subr.bf16.mxu0 %v2042
        %2643 = vmatpush1.bf16.msra.mxu0 %v2041
        %2644 = vmatprep.subr.bf16.mxu0 %v2046
        %2645 = vmatpush1.bf16.msra.mxu0 %v2045
        %2646 = vmatprep.subr.bf16.mxu0 %v2050
        %2647 = vmatpush1.bf16.msra.mxu0 %v2049
        %2648 = vmatprep.subr.bf16.mxu0 %v2054
        %2649 = vmatpush1.bf16.msra.mxu0 %v2053
        %2650 = vmatprep.subr.bf16.mxu0 %v2058
        %2651 = vmatpush1.bf16.msra.mxu0 %v2057
        %2652 = vmatprep.subr.bf16.mxu0 %v2062
        %2653 = vmatpush1.bf16.msra.mxu0 %v2061
        %2654 = vmatprep.subr.bf16.mxu0 %v2066
        %2655 = vmatpush1.bf16.msra.mxu0 %v2065
        %2656 = vmatprep.mubr.bf16.mxu0 %v1034
        %2657 = vmatmul.mubr.bf16.gmra.mrb[0].mxu0 %v1033
        %v2658 = vpop.f32.mrb[0].mxu0
        %v2659 = vadd.f32 %v2616, %v2658
        %v2660 = vpop.f32.mrb[0].mxu0
        %v2661 = vadd.f32 %v2618, %v2660
        %v2662 = vpop.f32.mrb[0].mxu0
        %v2663 = vadd.f32 %v2620, %v2662
        %v2664 = vpop.f32.mrb[0].mxu0
        %v2665 = vadd.f32 %v2622, %v2664
        %2666 = vdwg.mxu0
        %p2667 = scmp.eq.s32.totalorder %s20, 0
        // Predicated region
        $region52: #{a_call__.1} parent=46 // pred_check
          %p2668 = pneg %p2667
        $region53: #{a_call__.1} parent=46 // pred_check_branch
          %2670 = sbr.rel (%p2668) target = $region55
        $region54: #{a_call__.1} parent=46 // pred_region
          %2671 = vst [vmem:[%s722] sm:$0xff] %v2487
          %2672 = vst [vmem:[%s722 + $0x8] sm:$0xff] %v2489
          %2673 = vst [vmem:[%s722 + $0x10] sm:$0xff] %v2659
          %2674 = vst [vmem:[%s722 + $0x18] sm:$0xff] %v2661
          %2675 = vst [vmem:[%s722 + $0x20] sm:$0xff] %v2491
          %2676 = vst [vmem:[%s722 + $0x28] sm:$0xff] %v2493
          %2677 = vst [vmem:[%s722 + $0x30] sm:$0xff] %v2663
          %2678 = vst [vmem:[%s722 + $0x38] sm:$0xff] %v2665
        $region55: #{a_call__.1} parent=46 // pred_fallthru
          _
        %p2679 = scmp.gt.s32.totalorder %s20, 0
        // Predicated region
        $region56: #{a_call__.1} parent=46 // pred_check
          %p2680 = pneg %p2679
        $region57: #{a_call__.1} parent=46 // pred_check_branch
          %2682 = sbr.rel (%p2680) target = $region59
        $region58: #{a_call__.1} parent=46 // pred_region
          %v2683 = vld [vmem:[%s722] sm:$0xff]
          %v2684 = vld [vmem:[%s722 + $0x8] sm:$0xff]
          %v2685 = vld [vmem:[%s722 + $0x10] sm:$0xff]
          %v2686 = vld [vmem:[%s722 + $0x18] sm:$0xff]
          %v2687 = vld [vmem:[%s722 + $0x20] sm:$0xff]
          %v2688 = vld [vmem:[%s722 + $0x28] sm:$0xff]
          %v2689 = vld [vmem:[%s722 + $0x30] sm:$0xff]
          %v2690 = vld [vmem:[%s722 + $0x38] sm:$0xff]
          %v2691 = vadd.f32 %v2683, %v2487
          %v2692 = vadd.f32 %v2684, %v2489
          %v2693 = vadd.f32 %v2685, %v2659
          %v2694 = vadd.f32 %v2686, %v2661
          %v2695 = vadd.f32 %v2687, %v2491
          %v2696 = vadd.f32 %v2688, %v2493
          %v2697 = vadd.f32 %v2689, %v2663
          %v2698 = vadd.f32 %v2690, %v2665
          %2699 = vst [vmem:[%s722] sm:$0xff] %v2691
          %2700 = vst [vmem:[%s722 + $0x8] sm:$0xff] %v2692
          %2701 = vst [vmem:[%s722 + $0x10] sm:$0xff] %v2693
          %2702 = vst [vmem:[%s722 + $0x18] sm:$0xff] %v2694
          %2703 = vst [vmem:[%s722 + $0x20] sm:$0xff] %v2695
          %2704 = vst [vmem:[%s722 + $0x28] sm:$0xff] %v2696
          %2705 = vst [vmem:[%s722 + $0x30] sm:$0xff] %v2697
          %2706 = vst [vmem:[%s722 + $0x38] sm:$0xff] %v2698
        $region59: #{a_call__.1} parent=46 // pred_fallthru
          _
        %s2707 = sand.u32 %s98, 1
        %s2708 = sand.u32 %s98, 1
        %s2709 = smul.addr %s2708, 64
        %s2710 = scalar_lea.vmem [#allocation3], %s2709
        // Predicated region
        $region60: #{a_call__.1} parent=46 // pred_check
          %p2711 = pneg %p108
        $region61: #{a_call__.1} parent=46 // pred_check_branch
          %2713 = sbr.rel (%p2711) target = $region63
        $region62: #{a_call__.1} parent=46 // pred_region
          %s2714 = smul.u32 2, %s18
          %s2715 = smul.u32 4, %s19
          %s2716 = smul.addr %s2714, 8
          %s2717 = sadd.s32 %s2715, %s2716
          %s2718 = smul.addr %s2717, 8
          %s2719 = scalar_lea.vmem %s2, %s2718
          // Predicated region
          $region64: #{a_call__.1} parent=62 // pred_check
            _
          $region65: #{a_call__.1} parent=62 // pred_check_branch
            %2721 = sbr.rel (0) target = $region67
          $region66: #{a_call__.1} parent=62 // pred_region
            // Predicated region
            $region68: #{a_call__.1} parent=66 // pred_check
              _
            $region69: #{a_call__.1} parent=66 // pred_check_branch
              %2723 = sbr.rel (0) target = $region71
            $region70: #{a_call__.1} parent=66 // pred_region
              loop: start=0, step=1, limit=1
              $region72: #{a_call__.1} parent=70 // loop_pre_header
                _
              $region73: #{a_call__.1} parent=70 // loop_header
                %s2725 = sphi 0, %s2729
                %p2726 = scmp.ge.s32.totalorder %s2725, 1
                %s2730 = sphi %s2710, %s2710
                %s2731 = sphi %s2719, %s2719
              $region74: #{a_call__.1} parent=70 // loop_header_branch
                %2728 = sbr.rel (%p2726) target = $region78
              $region75: #{a_call__.1} parent=70 // loop_body
                %v2732 = vld [vmem:[%s2730] sm:$0xff]
                %2733 = vst [vmem:[%s2731] sm:$0xff] %v2732
                %v2734 = vld [vmem:[%s2730 + $0x8] sm:$0xff]
                %2735 = vst [vmem:[%s2731 + $0x8] sm:$0xff] %v2734
                %v2736 = vld [vmem:[%s2730 + $0x10] sm:$0xff]
                %2737 = vst [vmem:[%s2731 + $0x10] sm:$0xff] %v2736
                %v2738 = vld [vmem:[%s2730 + $0x18] sm:$0xff]
                %2739 = vst [vmem:[%s2731 + $0x18] sm:$0xff] %v2738
                %v2740 = vld [vmem:[%s2730 + $0x20] sm:$0xff]
                %2741 = vst [vmem:[%s2731 + $0x40] sm:$0xff] %v2740
                %v2742 = vld [vmem:[%s2730 + $0x28] sm:$0xff]
                %2743 = vst [vmem:[%s2731 + $0x48] sm:$0xff] %v2742
                %v2744 = vld [vmem:[%s2730 + $0x30] sm:$0xff]
                %2745 = vst [vmem:[%s2731 + $0x50] sm:$0xff] %v2744
                %v2746 = vld [vmem:[%s2730 + $0x38] sm:$0xff]
                %2747 = vst [vmem:[%s2731 + $0x58] sm:$0xff] %v2746
              $region76: #{a_call__.1} parent=70 // loop_footer
                %s2729 = sadd.s32 1, %s2725
              $region77: #{a_call__.1} parent=70 // loop_footer_branch
                %2724 = sbr.rel target = $region73
              $region78: #{a_call__.1} parent=70 // loop_exit
                _
            $region71: #{a_call__.1} parent=66 // pred_fallthru
              _
            // Predicated region
            $region79: #{a_call__.1} parent=66 // pred_check
              _
            $region80: #{a_call__.1} parent=66 // pred_check_branch
              %2749 = sbr.rel target = $region82
            $region81: #{a_call__.1} parent=66 // pred_region
              _
            $region82: #{a_call__.1} parent=66 // pred_fallthru
              _
          $region67: #{a_call__.1} parent=62 // pred_fallthru
            _
          %2750 = vnop
        $region63: #{a_call__.1} parent=46 // pred_fallthru
          _
      $region47: #{a_call__.1} parent=5 // pred_fallthru
        _
      %p2751 = scmp.le.s32.totalorder 2, %s8
      // Predicated region
      $region83: #{a_call__.1} parent=5 // pred_check
        %p2752 = pneg %p2751
      $region84: #{a_call__.1} parent=5 // pred_check_branch
        %2754 = sbr.rel (%p2752) target = $region86
      $region85: #{a_call__.1} parent=5 // pred_region
        %s2755 = ssub.s32 %s8, 2
        // Predicated region
        $region87: #{a_call__.1} parent=85 // pred_check
          %p2756 = pneg %p114
        $region88: #{a_call__.1} parent=85 // pred_check_branch
          %2758 = sbr.rel (%p2756) target = $region90
        $region89: #{a_call__.1} parent=85 // pred_region
          %s2759 = sand.u32 %s99, 1
          %s2760 = sand.u32 %s99, 1
          %s2761 = smul.addr %s2760, 64
          %s2762 = scalar_lea.vmem [#allocation3], %s2761
        $region90: #{a_call__.1} parent=85 // pred_fallthru
          _
      $region86: #{a_call__.1} parent=5 // pred_fallthru
        _
    $region6: #{a_call__.1} parent=1 // loop_footer
      %s12 = sadd.s32 1, %s8
    $region7: #{a_call__.1} parent=1 // loop_footer_branch
      %7 = sbr.rel target = $region3
    $region8: #{a_call__.1} parent=1 // loop_exit
      _

</llo_original>
